<compile_context>
chip_gen: v6e
topology: v6e:2x2x1
jax: 0.10.0
libtpu: 0.0.40
codegen_flags: <defaults>
</compile_context>

<pallas_src>
import functools

import jax
import jax.numpy as jnp
from jax import lax
from jax.experimental import pallas as pl
from jax.experimental.pallas import tpu as pltpu
from jax.scipy.linalg import solve_triangular

DEFAULT_POSITIVE_MINIMUM = 1e-5
DEFAULT_JITTER = 1e-10
# NOTE: padded data columns get this coordinate -> d2 ~ 1e12 -> exp underflows
# to exactly 0 in f32.  Assumes |X / lengthscale| << 1e6 (holds for any sane
# learned lengthscale; a pathologically tiny lengthscale would break this).
_PAD_SENTINEL = 1e6


def _cdiv(a, b):
    return -(-a // b)


def _detect_num_tensorcores():
    """TensorCores per chip: 2 on v7x-style chips, else 1 (v5e/v6e).

    Only unambiguous per-chip TensorCore attributes are trusted; anything else
    falls back to 1 (correct everywhere, merely loses the 2x split on v7x,
    which can be forced via num_splits=2).
    """
    try:
        info = pltpu.get_tpu_info()
    except Exception:
        return 1
    for attr in ("tensorcores_per_chip", "num_tensorcores",
                 "tensor_cores_per_chip", "cores_per_chip"):
        v = getattr(info, attr, None)
        if isinstance(v, int) and 1 <= v <= 8:
            return min(v, 2)
    return 1


_DEFAULT_NUM_SPLITS = _detect_num_tensorcores()


# ----------------------------------------------------------------------------
# Pallas kernel
# ----------------------------------------------------------------------------
def _se_reduce_kernel(zs_ref, xt_ref, et_ref, g_ref, h_ref, g_acc, h_acc):
    """Per N-tile: build the unscaled SE cross-kernel tile E (M, tn) and
    accumulate G += E E^T (MXU, bf16 operands / f32 acc) and
    h += E err (VPU mul + XLU lane reduction) into VMEM scratch."""
    i = pl.program_id(1)
    nt = pl.num_programs(1)

    @pl.when(i == 0)
    def _init():
        g_acc[...] = jnp.zeros_like(g_acc)
        h_acc[...] = jnp.zeros_like(h_acc)

    zs = zs_ref[...]            # (M, D)   inducing points / (ls * sqrt(2))
    xt = xt_ref[...]            # (D, TN)  lane-dense data tile / (ls * sqrt(2))
    et = et_ref[...]            # (1, TN)  lane-dense err tile

    M, D = zs.shape

    # Squared distances via explicit (z - x) differences over the small,
    # static feature axis (VPU-only; keeps the MXU free for the Gram update
    # and avoids the cancellation of the norm-expansion formula).  The SE
    # kernel's -0.5 is pre-folded into the coordinate scaling.
    diff = zs[:, 0:1] - xt[0:1, :]                   # (M,1)-(1,TN) -> (M,TN)
    d2 = diff * diff
    for d in range(1, D):
        diff = zs[:, d:d + 1] - xt[d:d + 1, :]
        d2 = d2 + diff * diff
    kexp = jnp.exp(-d2)                              # unscaled Kuf tile (M,TN)

    # G accumulation on the MXU: bf16 operands, f32 accumulation -> single
    # MXU pass per 8-sublane group instead of multi-pass f32 splitting.
    kexp_bf = kexp.astype(jnp.bfloat16)
    g_acc[...] += lax.dot_general(kexp_bf, kexp_bf, (((1,), (1,)), ((), ())),
                                  preferred_element_type=jnp.float32)
    # h accumulation on VPU (mul) + XLU (lane reduce): err stays f32-exact.
    h_acc[...] += jnp.sum(kexp * et, axis=1, keepdims=True)

    @pl.when(i == nt - 1)
    def _finalize():
        g_ref[...] = g_acc[...]
        h_ref[...] = h_acc[...]


def se_cross_stats(Zs, Xs, err, *, tn=16384, num_splits=None):
    """Returns (G, h) with G = E E^T (M,M), h = E err (M,1), where
    E[m,n] = exp(-||Zs[m] - Xs[n]||^2) and Zs, Xs are pre-scaled by
    1/(lengthscale*sqrt(2))."""
    M, D = Zs.shape
    N = Xs.shape[0]
    if num_splits is None:
        num_splits = _DEFAULT_NUM_SPLITS
    num_splits = max(1, int(num_splits))

    # Lane-dense layout: data axis along lanes.
    Xt = jnp.transpose(Xs)                # (D, N)
    et = jnp.reshape(err, (1, N))         # (1, N)

    # Tile choice: big tiles amortize the per-step pipeline overhead, but do
    # not blow up tiny problems with padding.
    per_split = _cdiv(N, num_splits)
    tn = int(min(tn, max(128, _cdiv(per_split, 128) * 128)))
    tiles_per_split = _cdiv(N, tn * num_splits)
    Np = tiles_per_split * tn * num_splits
    pad = Np - N
    if pad:
        # Sentinel coordinate makes exp(-d2) underflow to exactly 0 for padded
        # columns; zero err keeps h exact.
        Xt = jnp.pad(Xt, ((0, 0), (0, pad)), constant_values=_PAD_SENTINEL)
        et = jnp.pad(et, ((0, 0), (0, pad)), constant_values=0.0)

    def data_map(c, i):
        return (0, c * tiles_per_split + i)

    g, h = pl.pallas_call(
        _se_reduce_kernel,
        out_shape=(jax.ShapeDtypeStruct((num_splits, M, M), jnp.float32),
                   jax.ShapeDtypeStruct((num_splits, M, 1), jnp.float32)),
        grid=(num_splits, tiles_per_split),
        in_specs=[
            pl.BlockSpec((M, D), lambda c, i: (0, 0)),   # Zs, resident
            pl.BlockSpec((D, tn), data_map),             # X^T tile
            pl.BlockSpec((1, tn), data_map),             # err^T tile
        ],
        out_specs=(
            pl.BlockSpec((None, M, M), lambda c, i: (c, 0, 0)),
            pl.BlockSpec((None, M, 1), lambda c, i: (c, 0, 0)),
        ),
        scratch_shapes=[pltpu.VMEM((M, M), jnp.float32),
                        pltpu.VMEM((M, 1), jnp.float32)],
        compiler_params=pltpu.CompilerParams(
            dimension_semantics=("parallel", "arbitrary")),
    )(Zs, Xt, et)

    G = jnp.sum(g, axis=0)                # combine per-core partials
    h = jnp.sum(h, axis=0)
    return G, h


# ----------------------------------------------------------------------------
# Parameter transforms (PositiveVariable semantics)
# ----------------------------------------------------------------------------
def inverse_softplus_shifted(value, lower):
    x = value - lower
    return x + jnp.log(-jnp.expm1(-x))


def positive_transform(raw, lower):
    return lower + jax.nn.softplus(raw)


# ----------------------------------------------------------------------------
# SGPR forward (negative ELBO)
# ----------------------------------------------------------------------------
@functools.partial(jax.jit, static_argnames=("jitter", "tn", "num_splits"))
def sgpr_forward(X, Y, Z, raw_lengthscale, raw_signal_var, raw_noise_var,
                 jitter=DEFAULT_JITTER, tn=16384, num_splits=None):
    lengthscale = positive_transform(raw_lengthscale, DEFAULT_POSITIVE_MINIMUM)
    signal_var = positive_transform(raw_signal_var, DEFAULT_POSITIVE_MINIMUM)
    noise_var = positive_transform(raw_noise_var, DEFAULT_POSITIVE_MINIMUM)

    N = Y.shape[0]
    M = Z.shape[0]
    err = Y.astype(jnp.float32)  # mean_function == 0

    # Fold the SE kernel's -1/2 into the coordinate scaling:
    #   k(a, b) = exp(-||a - b||^2) with a, b divided by lengthscale*sqrt(2).
    inv_scale = (1.0 / (lengthscale * jnp.sqrt(jnp.float32(2.0))))
    Xs = (X * inv_scale).astype(jnp.float32)
    Zs = (Z * inv_scale).astype(jnp.float32)

    # --- Pallas hot path over the N axis ---
    G_u, h_u = se_cross_stats(Zs, Xs, err, tn=tn, num_splits=num_splits)
    G = (signal_var ** 2) * G_u          # Kuf @ Kuf^T
    h = signal_var * h_u                 # Kuf @ err
    sum_err2 = jnp.sum(err ** 2)         # O(N) scalar reduce: plain-JAX glue

    # Kuu (M x M): tiny -> plain JAX glue (no dedicated kernel launch).
    zz = jnp.sum(Zs * Zs, axis=1, keepdims=True)
    kuu = signal_var * jnp.exp(
        -jnp.maximum(zz + zz.T - 2.0 * (Zs @ Zs.T), 0.0))

    # --- small M x M linear algebra (glue, plain JAX) ---
    eye = jnp.eye(M, dtype=jnp.float32)
    # TODO(synk): torch `cholesky(safe=True)` retries with growing jitter; here
    # we apply a single fixed jitter (no data-dependent retry loop in-graph).
    L = jnp.linalg.cholesky(kuu + jitter * eye)
    sigma = jnp.sqrt(noise_var)

    tmp = solve_triangular(L, G, lower=True)
    AAT = solve_triangular(L, tmp.T, lower=True).T / noise_var
    B = AAT + eye
    LB = jnp.linalg.cholesky(B)
    Aerr = solve_triangular(L, h, lower=True) / sigma
    c = solve_triangular(LB, Aerr, lower=True) / sigma

    bound = -0.5 * N * jnp.log(2.0 * jnp.pi)
    bound += -jnp.sum(jnp.log(jnp.diag(LB)))
    bound -= 0.5 * N * jnp.log(noise_var)
    bound += -0.5 * sum_err2 / noise_var
    bound += 0.5 * jnp.sum(c ** 2)

    kdiag_sum = N * signal_var
    qff_sum = noise_var * jnp.trace(AAT)
    trace_term = 0.5 * (kdiag_sum - qff_sum) / noise_var
    # TODO(synk): torch's negative-trace warning / NaN branch needs per-column
    # Qff and host-side printing; omitted (trace_term is >= 0 analytically).
    bound -= trace_term
    return -1.0 * bound


# ----------------------------------------------------------------------------
# Pure-JAX reference mirroring the torch forward (for correctness check)
# ----------------------------------------------------------------------------
def ref_forward(X, Y, Z, raw_lengthscale, raw_signal_var, raw_noise_var,
                jitter=DEFAULT_JITTER):
    lengthscale = positive_transform(raw_lengthscale, DEFAULT_POSITIVE_MINIMUM)
    signal_var = positive_transform(raw_signal_var, DEFAULT_POSITIVE_MINIMUM)
    noise_var = positive_transform(raw_noise_var, DEFAULT_POSITIVE_MINIMUM)

    def se(a, b):
        a_s = a / lengthscale
        b_s = b / lengthscale
        d2 = (jnp.sum(a_s ** 2, 1)[:, None] + jnp.sum(b_s ** 2, 1)[None, :]
              - 2.0 * a_s @ b_s.T)
        return signal_var * jnp.exp(-0.5 * jnp.maximum(d2, 0.0))

    N = Y.shape[0]
    M = Z.shape[0]
    err = Y
    Kdiag = jnp.full((N,), signal_var)
    kuf = se(Z, X)
    kuu = se(Z, Z)
    L = jnp.linalg.cholesky(kuu + jitter * jnp.eye(M))
    sigma = jnp.sqrt(noise_var)
    A = solve_triangular(L, kuf, lower=True) / sigma
    AAT = A @ A.T
    LB = jnp.linalg.cholesky(AAT + jnp.eye(M))
    Aerr = A @ err
    c = solve_triangular(LB, Aerr, lower=True) / sigma
    bound = -0.5 * N * jnp.log(2.0 * jnp.pi)
    bound += -jnp.sum(jnp.log(jnp.diag(LB)))
    bound -= 0.5 * N * jnp.log(noise_var)
    bound += -0.5 * jnp.sum(err ** 2) / noise_var
    bound += 0.5 * jnp.sum(c ** 2)
    Qff = jnp.sum(A * A, axis=0) * noise_var
    bound -= 0.5 * jnp.sum(Kdiag - Qff) / noise_var
    return -1.0 * bound


if __name__ == "__main__":
    key = jax.random.PRNGKey(0)
    kx, ky = jax.random.split(key)

    N, D, M = 256, 8, 16
    X = jax.random.normal(kx, (N, D), dtype=jnp.float32)
    Y = (jnp.sin(jnp.sum(X, axis=1, keepdims=True))
         + 0.1 * jax.random.normal(ky, (N, 1), dtype=jnp.float32))
    # Inducing points: the torch default (all-ones) is degenerate before
    # greedy_selection runs; use a deterministic subset of X as stand-in init.
    Z = X[:M]

    raw_lengthscale = inverse_softplus_shifted(
        jnp.ones((D,), jnp.float32), DEFAULT_POSITIVE_MINIMUM)
    raw_signal_var = inverse_softplus_shifted(
        jnp.float32(1.0), DEFAULT_POSITIVE_MINIMUM)
    raw_noise_var = inverse_softplus_shifted(
        jnp.float32(0.01), DEFAULT_POSITIVE_MINIMUM)

    neg_elbo = sgpr_forward(X, Y, Z, raw_lengthscale, raw_signal_var,
                            raw_noise_var)
    neg_elbo = jax.block_until_ready(neg_elbo)

    ref = ref_forward(X, Y, Z, raw_lengthscale, raw_signal_var, raw_noise_var)
    ref = jax.block_until_ready(ref)

    rel_err = abs(float(neg_elbo) - float(ref)) / max(1.0, abs(float(ref)))
    assert jnp.isfinite(neg_elbo), "non-finite negative ELBO"
    assert rel_err < 5e-3, f"mismatch vs reference: {neg_elbo} vs {ref}"

    print("KERNEL_OK")
</pallas_src>

<mosaic_0001>
module attributes {stable_mosaic.version = 11 : i64} {
  func.func @_se_reduce_kernel(%arg0: i32, %arg1: i32, %arg2: memref<16x8xf32, #tpu.memory_space<vmem>>, %arg3: memref<8x256xf32, #tpu.memory_space<vmem>>, %arg4: memref<1x256xf32, #tpu.memory_space<vmem>>, %arg5: memref<1x16x16xf32, #tpu.memory_space<vmem>>, %arg6: memref<1x16x1xf32, #tpu.memory_space<vmem>>, %arg7: memref<16x16xf32, #tpu.memory_space<vmem>>, %arg8: memref<16x1xf32, #tpu.memory_space<vmem>>) attributes {dimension_semantics = [#tpu.dimension_semantics<parallel>, #tpu.dimension_semantics<arbitrary>], iteration_bounds = array<i64: 1, 1>, scalar_prefetch = 0 : i64, scratch_operands = 2 : i64, tpu.core_type = #tpu.core_type<tc>, window_params = [{pipeline_mode = #tpu.pipeline_mode<synchronous>, transform_indices = @transform_0, window_bounds = array<i64: 16, 8>}, {transform_indices = @transform_1, window_bounds = array<i64: 8, 256>}, {transform_indices = @transform_2, window_bounds = array<i64: 1, 256>}, {transform_indices = @transform_3, window_bounds = array<i64: 1, 16, 16>}, {transform_indices = @transform_4, window_bounds = array<i64: 1, 16, 1>}]} {
    %c0_i32 = arith.constant 0 : i32
    %0 = arith.cmpi eq, %arg1, %c0_i32 : i32
    %1 = arith.extui %0 : i1 to i32
    %c0_i32_0 = arith.constant 0 : i32
    %2 = arith.cmpi ne, %1, %c0_i32_0 : i32
    scf.if %2 {
      %cst_18 = arith.constant 0.000000e+00 : f32
      %79 = vector.broadcast %cst_18 : f32 to vector<16x16xf32>
      %c0_19 = arith.constant 0 : index
      %c0_20 = arith.constant 0 : index
      %80 = vector.load %arg7[%c0_19, %c0_20] : memref<16x16xf32, #tpu.memory_space<vmem>>, vector<16x16xf32>
      tpu.vector_store %arg7[%c0_19, %c0_20], %79 {strides = array<i32>} : memref<16x16xf32, #tpu.memory_space<vmem>>, vector<16x16xf32>,
      %cst_21 = arith.constant 0.000000e+00 : f32
      %81 = vector.broadcast %cst_21 : f32 to vector<16x1xf32>
      %c0_22 = arith.constant 0 : index
      %c0_23 = arith.constant 0 : index
      %82 = vector.load %arg8[%c0_22, %c0_23] : memref<16x1xf32, #tpu.memory_space<vmem>>, vector<16x1xf32>
      tpu.vector_store %arg8[%c0_22, %c0_23], %81 {strides = array<i32>} : memref<16x1xf32, #tpu.memory_space<vmem>>, vector<16x1xf32>,
    } else {
    }
    %c0 = arith.constant 0 : index
    %c0_1 = arith.constant 0 : index
    %3 = vector.load %arg2[%c0, %c0_1] : memref<16x8xf32, #tpu.memory_space<vmem>>, vector<16x8xf32>
    %c0_2 = arith.constant 0 : index
    %c0_3 = arith.constant 0 : index
    %4 = vector.load %arg3[%c0_2, %c0_3] : memref<8x256xf32, #tpu.memory_space<vmem>>, vector<8x256xf32>
    %c0_4 = arith.constant 0 : index
    %c0_5 = arith.constant 0 : index
    %5 = vector.load %arg4[%c0_4, %c0_5] : memref<1x256xf32, #tpu.memory_space<vmem>>, vector<1x256xf32>
    %6 = vector.extract_strided_slice %3 {offsets = [0, 0], sizes = [16, 1], strides = [1, 1]} : vector<16x8xf32> to vector<16x1xf32>
    %7 = vector.extract_strided_slice %4 {offsets = [0, 0], sizes = [1, 256], strides = [1, 1]} : vector<8x256xf32> to vector<1x256xf32>
    %8 = vector.broadcast %6 : vector<16x1xf32> to vector<16x256xf32>
    %9 = vector.broadcast %7 : vector<1x256xf32> to vector<16x256xf32>
    %10 = arith.subf %8, %9 : vector<16x256xf32>
    %11 = arith.mulf %10, %10 : vector<16x256xf32>
    %12 = vector.extract_strided_slice %3 {offsets = [0, 1], sizes = [16, 1], strides = [1, 1]} : vector<16x8xf32> to vector<16x1xf32>
    %13 = vector.extract_strided_slice %4 {offsets = [1, 0], sizes = [1, 256], strides = [1, 1]} : vector<8x256xf32> to vector<1x256xf32>
    %14 = vector.broadcast %12 : vector<16x1xf32> to vector<16x256xf32>
    %15 = vector.broadcast %13 : vector<1x256xf32> to vector<16x256xf32>
    %16 = arith.subf %14, %15 : vector<16x256xf32>
    %17 = arith.mulf %16, %16 : vector<16x256xf32>
    %18 = arith.addf %11, %17 : vector<16x256xf32>
    %19 = vector.extract_strided_slice %3 {offsets = [0, 2], sizes = [16, 1], strides = [1, 1]} : vector<16x8xf32> to vector<16x1xf32>
    %20 = vector.extract_strided_slice %4 {offsets = [2, 0], sizes = [1, 256], strides = [1, 1]} : vector<8x256xf32> to vector<1x256xf32>
    %21 = vector.broadcast %19 : vector<16x1xf32> to vector<16x256xf32>
    %22 = vector.broadcast %20 : vector<1x256xf32> to vector<16x256xf32>
    %23 = arith.subf %21, %22 : vector<16x256xf32>
    %24 = arith.mulf %23, %23 : vector<16x256xf32>
    %25 = arith.addf %18, %24 : vector<16x256xf32>
    %26 = vector.extract_strided_slice %3 {offsets = [0, 3], sizes = [16, 1], strides = [1, 1]} : vector<16x8xf32> to vector<16x1xf32>
    %27 = vector.extract_strided_slice %4 {offsets = [3, 0], sizes = [1, 256], strides = [1, 1]} : vector<8x256xf32> to vector<1x256xf32>
    %28 = vector.broadcast %26 : vector<16x1xf32> to vector<16x256xf32>
    %29 = vector.broadcast %27 : vector<1x256xf32> to vector<16x256xf32>
    %30 = arith.subf %28, %29 : vector<16x256xf32>
    %31 = arith.mulf %30, %30 : vector<16x256xf32>
    %32 = arith.addf %25, %31 : vector<16x256xf32>
    %33 = vector.extract_strided_slice %3 {offsets = [0, 4], sizes = [16, 1], strides = [1, 1]} : vector<16x8xf32> to vector<16x1xf32>
    %34 = vector.extract_strided_slice %4 {offsets = [4, 0], sizes = [1, 256], strides = [1, 1]} : vector<8x256xf32> to vector<1x256xf32>
    %35 = vector.broadcast %33 : vector<16x1xf32> to vector<16x256xf32>
    %36 = vector.broadcast %34 : vector<1x256xf32> to vector<16x256xf32>
    %37 = arith.subf %35, %36 : vector<16x256xf32>
    %38 = arith.mulf %37, %37 : vector<16x256xf32>
    %39 = arith.addf %32, %38 : vector<16x256xf32>
    %40 = vector.extract_strided_slice %3 {offsets = [0, 5], sizes = [16, 1], strides = [1, 1]} : vector<16x8xf32> to vector<16x1xf32>
    %41 = vector.extract_strided_slice %4 {offsets = [5, 0], sizes = [1, 256], strides = [1, 1]} : vector<8x256xf32> to vector<1x256xf32>
    %42 = vector.broadcast %40 : vector<16x1xf32> to vector<16x256xf32>
    %43 = vector.broadcast %41 : vector<1x256xf32> to vector<16x256xf32>
    %44 = arith.subf %42, %43 : vector<16x256xf32>
    %45 = arith.mulf %44, %44 : vector<16x256xf32>
    %46 = arith.addf %39, %45 : vector<16x256xf32>
    %47 = vector.extract_strided_slice %3 {offsets = [0, 6], sizes = [16, 1], strides = [1, 1]} : vector<16x8xf32> to vector<16x1xf32>
    %48 = vector.extract_strided_slice %4 {offsets = [6, 0], sizes = [1, 256], strides = [1, 1]} : vector<8x256xf32> to vector<1x256xf32>
    %49 = vector.broadcast %47 : vector<16x1xf32> to vector<16x256xf32>
    %50 = vector.broadcast %48 : vector<1x256xf32> to vector<16x256xf32>
    %51 = arith.subf %49, %50 : vector<16x256xf32>
    %52 = arith.mulf %51, %51 : vector<16x256xf32>
    %53 = arith.addf %46, %52 : vector<16x256xf32>
    %54 = vector.extract_strided_slice %3 {offsets = [0, 7], sizes = [16, 1], strides = [1, 1]} : vector<16x8xf32> to vector<16x1xf32>
    %55 = vector.extract_strided_slice %4 {offsets = [7, 0], sizes = [1, 256], strides = [1, 1]} : vector<8x256xf32> to vector<1x256xf32>
    %56 = vector.broadcast %54 : vector<16x1xf32> to vector<16x256xf32>
    %57 = vector.broadcast %55 : vector<1x256xf32> to vector<16x256xf32>
    %58 = arith.subf %56, %57 : vector<16x256xf32>
    %59 = arith.mulf %58, %58 : vector<16x256xf32>
    %60 = arith.addf %53, %59 : vector<16x256xf32>
    %cst = arith.constant 0.000000e+00 : f32
    %61 = vector.broadcast %cst : f32 to vector<16x256xf32>
    %62 = arith.subf %61, %60 : vector<16x256xf32>
    %63 = math.exp %62 : vector<16x256xf32>
    %64 = arith.truncf %63 : vector<16x256xf32> to vector<16x256xbf16>
    %c0_6 = arith.constant 0 : index
    %c0_7 = arith.constant 0 : index
    %65 = vector.load %arg7[%c0_6, %c0_7] : memref<16x16xf32, #tpu.memory_space<vmem>>, vector<16x16xf32>
    %cst_8 = arith.constant dense<0.000000e+00> : vector<16x16xf32>
    %66 = tpu.matmul %64, %64, %cst_8 {dimension_numbers = #tpu.dot_dimension_numbers<[1], [1], [0], [0], [0, 0, 1, 0], [], []>} : vector<16x256xbf16>, vector<16x256xbf16>, vector<16x16xf32> -> vector<16x16xf32>
    %67 = arith.addf %65, %66 : vector<16x16xf32>
    %c0_9 = arith.constant 0 : index
    %c0_10 = arith.constant 0 : index
    %68 = vector.load %arg7[%c0_9, %c0_10] : memref<16x16xf32, #tpu.memory_space<vmem>>, vector<16x16xf32>
    tpu.vector_store %arg7[%c0_9, %c0_10], %67 {strides = array<i32>} : memref<16x16xf32, #tpu.memory_space<vmem>>, vector<16x16xf32>,
    %c0_11 = arith.constant 0 : index
    %c0_12 = arith.constant 0 : index
    %69 = vector.load %arg8[%c0_11, %c0_12] : memref<16x1xf32, #tpu.memory_space<vmem>>, vector<16x1xf32>
    %70 = vector.broadcast %5 : vector<1x256xf32> to vector<16x256xf32>
    %71 = arith.mulf %63, %70 : vector<16x256xf32>
    %cst_13 = arith.constant dense<0.000000e+00> : vector<16xf32>
    %72 = vector.multi_reduction <add>, %71, %cst_13 [1] : vector<16x256xf32> to vector<16xf32>
    %73 = vector.shape_cast %72 : vector<16xf32> to vector<16x1xf32>
    %74 = arith.addf %69, %73 : vector<16x1xf32>
    %c0_14 = arith.constant 0 : index
    %c0_15 = arith.constant 0 : index
    %75 = vector.load %arg8[%c0_14, %c0_15] : memref<16x1xf32, #tpu.memory_space<vmem>>, vector<16x1xf32>
    tpu.vector_store %arg8[%c0_14, %c0_15], %74 {strides = array<i32>} : memref<16x1xf32, #tpu.memory_space<vmem>>, vector<16x1xf32>,
    %c0_i32_16 = arith.constant 0 : i32
    %76 = arith.cmpi eq, %arg1, %c0_i32_16 : i32
    %77 = arith.extui %76 : i1 to i32
    %c0_i32_17 = arith.constant 0 : i32
    %78 = arith.cmpi ne, %77, %c0_i32_17 : i32
    scf.if %78 {
      %c0_18 = arith.constant 0 : index
      %c0_19 = arith.constant 0 : index
      %79 = vector.load %arg7[%c0_18, %c0_19] : memref<16x16xf32, #tpu.memory_space<vmem>>, vector<16x16xf32>
      %c0_20 = arith.constant 0 : index
      %c0_21 = arith.constant 0 : index
      %c0_22 = arith.constant 0 : index
      %80 = vector.load %arg5[%c0_20, %c0_21, %c0_22] : memref<1x16x16xf32, #tpu.memory_space<vmem>>, vector<1x16x16xf32>
      %81 = vector.shape_cast %80 : vector<1x16x16xf32> to vector<16x16xf32>
      %82 = vector.shape_cast %79 : vector<16x16xf32> to vector<1x16x16xf32>
      tpu.vector_store %arg5[%c0_20, %c0_21, %c0_22], %82 {strides = array<i32>} : memref<1x16x16xf32, #tpu.memory_space<vmem>>, vector<1x16x16xf32>,
      %c0_23 = arith.constant 0 : index
      %c0_24 = arith.constant 0 : index
      %83 = vector.load %arg8[%c0_23, %c0_24] : memref<16x1xf32, #tpu.memory_space<vmem>>, vector<16x1xf32>
      %c0_25 = arith.constant 0 : index
      %c0_26 = arith.constant 0 : index
      %c0_27 = arith.constant 0 : index
      %84 = vector.load %arg6[%c0_25, %c0_26, %c0_27] : memref<1x16x1xf32, #tpu.memory_space<vmem>>, vector<1x16x1xf32>
      %85 = vector.shape_cast %84 : vector<1x16x1xf32> to vector<16x1xf32>
      %86 = vector.shape_cast %83 : vector<16x1xf32> to vector<1x16x1xf32>
      tpu.vector_store %arg6[%c0_25, %c0_26, %c0_27], %86 {strides = array<i32>} : memref<1x16x1xf32, #tpu.memory_space<vmem>>, vector<1x16x1xf32>,
    } else {
    }
    return
  }
  func.func @transform_0(%arg0: i32, %arg1: i32) -> (i32, i32) {
    %c0_i32 = arith.constant 0 : i32
    %c0_i32_0 = arith.constant 0 : i32
    %c0_i32_1 = arith.constant 0 : i32
    return %c0_i32, %c0_i32_0 : i32, i32
  }
  func.func @transform_1(%arg0: i32, %arg1: i32) -> (i32, i32) {
    %c1_i32 = arith.constant 1 : i32
    %0 = arith.muli %arg0, %c1_i32 : i32
    %1 = arith.addi %0, %arg1 : i32
    %c0_i32 = arith.constant 0 : i32
    %c0_i32_0 = arith.constant 0 : i32
    return %c0_i32, %1 : i32, i32
  }
  func.func @transform_2(%arg0: i32, %arg1: i32) -> (i32, i32) {
    %c1_i32 = arith.constant 1 : i32
    %0 = arith.muli %arg0, %c1_i32 : i32
    %1 = arith.addi %0, %arg1 : i32
    %c0_i32 = arith.constant 0 : i32
    %c0_i32_0 = arith.constant 0 : i32
    return %c0_i32, %1 : i32, i32
  }
  func.func @transform_3(%arg0: i32, %arg1: i32) -> (i32, i32, i32) {
    %c0_i32 = arith.constant 0 : i32
    %c0_i32_0 = arith.constant 0 : i32
    %c0_i32_1 = arith.constant 0 : i32
    return %arg0, %c0_i32, %c0_i32_0 : i32, i32, i32
  }
  func.func @transform_4(%arg0: i32, %arg1: i32) -> (i32, i32, i32) {
    %c0_i32 = arith.constant 0 : i32
    %c0_i32_0 = arith.constant 0 : i32
    %c0_i32_1 = arith.constant 0 : i32
    return %arg0, %c0_i32, %c0_i32_0 : i32, i32, i32
  }
}

</mosaic_0001>

<llo_original>
// kernel: custom-call.11
$region0: #{custom-call.11}
  %s0 = inlined_call_operand.vmem [shape: f32[16,16], index: 0, kind: input, shape index: {}]
  %s1 = inlined_call_operand.vmem [shape: f32[16,16], index: 1, kind: output, shape index: {}]
  $region1: #{custom-call.11} parent=0
    #allocation0 [shape = 'u8[8192]{0}', space=vmem, size = 0x2000, scoped, tag = 'operand span for operand 0']
    #allocation1 [shape = 'u8[8192]{0}', space=vmem, size = 0x2000, scoped, tag = 'operand span for operand 1']
    // Predicated region
    $region2: #{custom-call.11} parent=1 // pred_check
      _
    $region3: #{custom-call.11} parent=1 // pred_check_branch
      %3 = sbr.rel (0) target = $region5
    $region4: #{custom-call.11} parent=1 // pred_region
      // Predicated region
      $region6: #{custom-call.11} parent=4 // pred_check
        _
      $region7: #{custom-call.11} parent=4 // pred_check_branch
        %5 = sbr.rel (0) target = $region9
      $region8: #{custom-call.11} parent=4 // pred_region
        // Predicated region
        $region21: #{custom-call.11} parent=8 // pred_check
          _
        $region22: #{custom-call.11} parent=8 // pred_check_branch
          %23 = sbr.rel (0) target = $region24
        $region23: #{custom-call.11} parent=8 // pred_region
          loop: start=0, step=1, limit=1
          $region25: #{custom-call.11} parent=23 // loop_pre_header
            _
          $region26: #{custom-call.11} parent=23 // loop_header
            %s25 = sphi 0, %s29
            %p26 = scmp.ge.s32.totalorder %s25, 1
            %s30 = sphi %s0, %s0
            %s31 = sphi [#allocation0], [#allocation0]
          $region27: #{custom-call.11} parent=23 // loop_header_branch
            %28 = sbr.rel (%p26) target = $region31
          $region28: #{custom-call.11} parent=23 // loop_body
            %v32 = vld [vmem:[%s30] sm:$0xff]
            %33 = vst [vmem:[%s31] sm:$0xff] %v32
            %v34 = vld [vmem:[%s30 + $0x8] sm:$0xff]
            %35 = vst [vmem:[%s31 + $0x8] sm:$0xff] %v34
          $region29: #{custom-call.11} parent=23 // loop_footer
            %s29 = sadd.s32 1, %s25
          $region30: #{custom-call.11} parent=23 // loop_footer_branch
            %24 = sbr.rel target = $region26
          $region31: #{custom-call.11} parent=23 // loop_exit
            _
        $region24: #{custom-call.11} parent=8 // pred_fallthru
          _
        // Predicated region
        $region32: #{custom-call.11} parent=8 // pred_check
          _
        $region33: #{custom-call.11} parent=8 // pred_check_branch
          %37 = sbr.rel target = $region35
        $region34: #{custom-call.11} parent=8 // pred_region
          _
        $region35: #{custom-call.11} parent=8 // pred_fallthru
          _
      $region9: #{custom-call.11} parent=4 // pred_fallthru
        _
      // Predicated region
      $region10: #{custom-call.11} parent=4 // pred_check
        _
      $region11: #{custom-call.11} parent=4 // pred_check_branch
        %7 = sbr.rel target = $region13
      $region12: #{custom-call.11} parent=4 // pred_region
        %s9 = ssub.s32 256, 1
        loop: start=0, step=1, limit=1
        $region14: #{custom-call.11} parent=12 // loop_pre_header
          _
        $region15: #{custom-call.11} parent=12 // loop_header
          %s11 = sphi 0, %s15
          %p12 = scmp.ge.s32.totalorder %s11, 1
          %s16 = sphi %s0, %s0
          %s17 = sphi [#allocation0], [#allocation0]
        $region16: #{custom-call.11} parent=12 // loop_header_branch
          %14 = sbr.rel (%p12) target = $region20
        $region17: #{custom-call.11} parent=12 // loop_body
          %v18 = vld [vmem:[%s16] sm:%s9]
          %19 = vst [vmem:[%s17] sm:%s9] %v18
          %v20 = vld [vmem:[%s16 + $0x8] sm:%s9]
          %21 = vst [vmem:[%s17 + $0x8] sm:%s9] %v20
        $region18: #{custom-call.11} parent=12 // loop_footer
          %s15 = sadd.s32 1, %s11
        $region19: #{custom-call.11} parent=12 // loop_footer_branch
          %10 = sbr.rel target = $region15
        $region20: #{custom-call.11} parent=12 // loop_exit
          _
      $region13: #{custom-call.11} parent=4 // pred_fallthru
        _
    $region5: #{custom-call.11} parent=1 // pred_fallthru
      _
    %38 = vnop
    %39 = vst [vmem:[#allocation1] sm:$0xff] 0.0
    %s40 = scalar_lea.vmem [#allocation1], 8
    %41 = vst [vmem:[%s40] sm:$0xff] 0.0
    %vm42 = vcmask 7168
    %v43 = vld [vmem:[#allocation1] ss:$0 sm:$0xff]
    %v44 = vld [vmem:[#allocation0] ss:$0 sm:$0xff]
    %v45 = vmul.f32 %v43, %v43
    %46 = vadd.xlane.f32.xlu0 %v45
    %v47 = vpop.xlane.xlu0 %46
    %v48 = vsub.f32 %v44, %v47
    %v49 = vrsqrt.pop %v48
    %v50 = vld [vmem:[#allocation0] sm:$0xff]
    %v51 = vld [vmem:[#allocation1] sm:$0xff]
    %v52 = vmul.f32 %v51, %v43
    %53 = vadd.xlane.f32.xlu0 %v52
    %v54 = vpop.xlane.xlu0 %53
    %v55 = vsub.f32 %v50, %v54
    %v56 = vmul.f32 %v55, %v49
    %v57 = vsel %vm42, %v56, 0.0
    %v58 = vadd.f32 %v51, %v57
    %59 = vst [vmem:[#allocation1] sm:$0xff] %v58
    %s60 = scalar_lea.vmem [#allocation0], 8
    %v61 = vld [vmem:[%s60] sm:$0xff]
    %s62 = scalar_lea.vmem [#allocation1], 8
    %v63 = vld [vmem:[%s62] sm:$0xff]
    %v64 = vmul.f32 %v63, %v43
    %65 = vadd.xlane.f32.xlu0 %v64
    %v66 = vpop.xlane.xlu0 %65
    %v67 = vsub.f32 %v61, %v66
    %v68 = vmul.f32 %v67, %v49
    %v69 = vsel %vm42, %v68, 0.0
    %v70 = vadd.f32 %v63, %v69
    %s71 = scalar_lea.vmem [#allocation1], 8
    %72 = vst [vmem:[%s71] sm:$0xff] %v70
    %vm73 = vcmask 15368
    %s74 = scalar_lea.vmem [#allocation1], 1
    %v75 = vld [vmem:[%s74] ss:$0 sm:$0xff]
    %s76 = scalar_lea.vmem [#allocation0], 1
    %v77 = vld [vmem:[%s76] ss:$0 sm:$0xff]
    %v78 = vmul.f32 %v75, %v75
    %79 = vadd.xlane.f32.xlu0 %v78
    %v80 = vpop.xlane.xlu0 %79
    %v81 = vsub.f32 %v77, %v80
    %v82 = vrsqrt.pop %v81
    %v83 = vld [vmem:[#allocation0] sm:$0xff]
    %v84 = vld [vmem:[#allocation1] sm:$0xff]
    %v85 = vmul.f32 %v84, %v75
    %86 = vadd.xlane.f32.xlu0 %v85
    %v87 = vpop.xlane.xlu0 %86
    %v88 = vsub.f32 %v83, %v87
    %v89 = vmul.f32 %v88, %v82
    %vm90 = vcmask 1047553
    %vm91 = vmand %vm73, %vm90
    %v92 = vsel %vm91, %v89, 0.0
    %v93 = vadd.f32 %v84, %v92
    %94 = vst [vmem:[#allocation1] sm:$0xff] %v93
    %s95 = scalar_lea.vmem [#allocation0], 8
    %v96 = vld [vmem:[%s95] sm:$0xff]
    %s97 = scalar_lea.vmem [#allocation1], 8
    %v98 = vld [vmem:[%s97] sm:$0xff]
    %v99 = vmul.f32 %v98, %v75
    %100 = vadd.xlane.f32.xlu0 %v99
    %v101 = vpop.xlane.xlu0 %100
    %v102 = vsub.f32 %v96, %v101
    %v103 = vmul.f32 %v102, %v82
    %v104 = vsel %vm73, %v103, 0.0
    %v105 = vadd.f32 %v98, %v104
    %s106 = scalar_lea.vmem [#allocation1], 8
    %107 = vst [vmem:[%s106] sm:$0xff] %v105
    %vm108 = vcmask 23568
    %s109 = scalar_lea.vmem [#allocation1], 2
    %v110 = vld [vmem:[%s109] ss:$0 sm:$0xff]
    %s111 = scalar_lea.vmem [#allocation0], 2
    %v112 = vld [vmem:[%s111] ss:$0 sm:$0xff]
    %v113 = vmul.f32 %v110, %v110
    %114 = vadd.xlane.f32.xlu0 %v113
    %v115 = vpop.xlane.xlu0 %114
    %v116 = vsub.f32 %v112, %v115
    %v117 = vrsqrt.pop %v116
    %v118 = vld [vmem:[#allocation0] sm:$0xff]
    %v119 = vld [vmem:[#allocation1] sm:$0xff]
    %v120 = vmul.f32 %v119, %v110
    %121 = vadd.xlane.f32.xlu0 %v120
    %v122 = vpop.xlane.xlu0 %121
    %v123 = vsub.f32 %v118, %v122
    %v124 = vmul.f32 %v123, %v117
    %vm125 = vcmask 1047554
    %vm126 = vmand %vm108, %vm125
    %v127 = vsel %vm126, %v124, 0.0
    %v128 = vadd.f32 %v119, %v127
    %129 = vst [vmem:[#allocation1] sm:$0xff] %v128
    %s130 = scalar_lea.vmem [#allocation0], 8
    %v131 = vld [vmem:[%s130] sm:$0xff]
    %s132 = scalar_lea.vmem [#allocation1], 8
    %v133 = vld [vmem:[%s132] sm:$0xff]
    %v134 = vmul.f32 %v133, %v110
    %135 = vadd.xlane.f32.xlu0 %v134
    %v136 = vpop.xlane.xlu0 %135
    %v137 = vsub.f32 %v131, %v136
    %v138 = vmul.f32 %v137, %v117
    %v139 = vsel %vm108, %v138, 0.0
    %v140 = vadd.f32 %v133, %v139
    %s141 = scalar_lea.vmem [#allocation1], 8
    %142 = vst [vmem:[%s141] sm:$0xff] %v140
    %vm143 = vcmask 31768
    %s144 = scalar_lea.vmem [#allocation1], 3
    %v145 = vld [vmem:[%s144] ss:$0 sm:$0xff]
    %s146 = scalar_lea.vmem [#allocation0], 3
    %v147 = vld [vmem:[%s146] ss:$0 sm:$0xff]
    %v148 = vmul.f32 %v145, %v145
    %149 = vadd.xlane.f32.xlu0 %v148
    %v150 = vpop.xlane.xlu0 %149
    %v151 = vsub.f32 %v147, %v150
    %v152 = vrsqrt.pop %v151
    %v153 = vld [vmem:[#allocation0] sm:$0xff]
    %v154 = vld [vmem:[#allocation1] sm:$0xff]
    %v155 = vmul.f32 %v154, %v145
    %156 = vadd.xlane.f32.xlu0 %v155
    %v157 = vpop.xlane.xlu0 %156
    %v158 = vsub.f32 %v153, %v157
    %v159 = vmul.f32 %v158, %v152
    %vm160 = vcmask 1047555
    %vm161 = vmand %vm143, %vm160
    %v162 = vsel %vm161, %v159, 0.0
    %v163 = vadd.f32 %v154, %v162
    %164 = vst [vmem:[#allocation1] sm:$0xff] %v163
    %s165 = scalar_lea.vmem [#allocation0], 8
    %v166 = vld [vmem:[%s165] sm:$0xff]
    %s167 = scalar_lea.vmem [#allocation1], 8
    %v168 = vld [vmem:[%s167] sm:$0xff]
    %v169 = vmul.f32 %v168, %v145
    %170 = vadd.xlane.f32.xlu0 %v169
    %v171 = vpop.xlane.xlu0 %170
    %v172 = vsub.f32 %v166, %v171
    %v173 = vmul.f32 %v172, %v152
    %v174 = vsel %vm143, %v173, 0.0
    %v175 = vadd.f32 %v168, %v174
    %s176 = scalar_lea.vmem [#allocation1], 8
    %177 = vst [vmem:[%s176] sm:$0xff] %v175
    %vm178 = vcmask 39968
    %s179 = scalar_lea.vmem [#allocation1], 4
    %v180 = vld [vmem:[%s179] ss:$0 sm:$0xff]
    %s181 = scalar_lea.vmem [#allocation0], 4
    %v182 = vld [vmem:[%s181] ss:$0 sm:$0xff]
    %v183 = vmul.f32 %v180, %v180
    %184 = vadd.xlane.f32.xlu0 %v183
    %v185 = vpop.xlane.xlu0 %184
    %v186 = vsub.f32 %v182, %v185
    %v187 = vrsqrt.pop %v186
    %v188 = vld [vmem:[#allocation0] sm:$0xff]
    %v189 = vld [vmem:[#allocation1] sm:$0xff]
    %v190 = vmul.f32 %v189, %v180
    %191 = vadd.xlane.f32.xlu0 %v190
    %v192 = vpop.xlane.xlu0 %191
    %v193 = vsub.f32 %v188, %v192
    %v194 = vmul.f32 %v193, %v187
    %vm195 = vcmask 1047556
    %vm196 = vmand %vm178, %vm195
    %v197 = vsel %vm196, %v194, 0.0
    %v198 = vadd.f32 %v189, %v197
    %199 = vst [vmem:[#allocation1] sm:$0xff] %v198
    %s200 = scalar_lea.vmem [#allocation0], 8
    %v201 = vld [vmem:[%s200] sm:$0xff]
    %s202 = scalar_lea.vmem [#allocation1], 8
    %v203 = vld [vmem:[%s202] sm:$0xff]
    %v204 = vmul.f32 %v203, %v180
    %205 = vadd.xlane.f32.xlu0 %v204
    %v206 = vpop.xlane.xlu0 %205
    %v207 = vsub.f32 %v201, %v206
    %v208 = vmul.f32 %v207, %v187
    %v209 = vsel %vm178, %v208, 0.0
    %v210 = vadd.f32 %v203, %v209
    %s211 = scalar_lea.vmem [#allocation1], 8
    %212 = vst [vmem:[%s211] sm:$0xff] %v210
    %vm213 = vcmask 48168
    %s214 = scalar_lea.vmem [#allocation1], 5
    %v215 = vld [vmem:[%s214] ss:$0 sm:$0xff]
    %s216 = scalar_lea.vmem [#allocation0], 5
    %v217 = vld [vmem:[%s216] ss:$0 sm:$0xff]
    %v218 = vmul.f32 %v215, %v215
    %219 = vadd.xlane.f32.xlu0 %v218
    %v220 = vpop.xlane.xlu0 %219
    %v221 = vsub.f32 %v217, %v220
    %v222 = vrsqrt.pop %v221
    %v223 = vld [vmem:[#allocation0] sm:$0xff]
    %v224 = vld [vmem:[#allocation1] sm:$0xff]
    %v225 = vmul.f32 %v224, %v215
    %226 = vadd.xlane.f32.xlu0 %v225
    %v227 = vpop.xlane.xlu0 %226
    %v228 = vsub.f32 %v223, %v227
    %v229 = vmul.f32 %v228, %v222
    %vm230 = vcmask 1047557
    %vm231 = vmand %vm213, %vm230
    %v232 = vsel %vm231, %v229, 0.0
    %v233 = vadd.f32 %v224, %v232
    %234 = vst [vmem:[#allocation1] sm:$0xff] %v233
    %s235 = scalar_lea.vmem [#allocation0], 8
    %v236 = vld [vmem:[%s235] sm:$0xff]
    %s237 = scalar_lea.vmem [#allocation1], 8
    %v238 = vld [vmem:[%s237] sm:$0xff]
    %v239 = vmul.f32 %v238, %v215
    %240 = vadd.xlane.f32.xlu0 %v239
    %v241 = vpop.xlane.xlu0 %240
    %v242 = vsub.f32 %v236, %v241
    %v243 = vmul.f32 %v242, %v222
    %v244 = vsel %vm213, %v243, 0.0
    %v245 = vadd.f32 %v238, %v244
    %s246 = scalar_lea.vmem [#allocation1], 8
    %247 = vst [vmem:[%s246] sm:$0xff] %v245
    %vm248 = vcmask 56368
    %s249 = scalar_lea.vmem [#allocation1], 6
    %v250 = vld [vmem:[%s249] ss:$0 sm:$0xff]
    %s251 = scalar_lea.vmem [#allocation0], 6
    %v252 = vld [vmem:[%s251] ss:$0 sm:$0xff]
    %v253 = vmul.f32 %v250, %v250
    %254 = vadd.xlane.f32.xlu0 %v253
    %v255 = vpop.xlane.xlu0 %254
    %v256 = vsub.f32 %v252, %v255
    %v257 = vrsqrt.pop %v256
    %v258 = vld [vmem:[#allocation0] sm:$0xff]
    %v259 = vld [vmem:[#allocation1] sm:$0xff]
    %v260 = vmul.f32 %v259, %v250
    %261 = vadd.xlane.f32.xlu0 %v260
    %v262 = vpop.xlane.xlu0 %261
    %v263 = vsub.f32 %v258, %v262
    %v264 = vmul.f32 %v263, %v257
    %vm265 = vcmask 1047558
    %vm266 = vmand %vm248, %vm265
    %v267 = vsel %vm266, %v264, 0.0
    %v268 = vadd.f32 %v259, %v267
    %269 = vst [vmem:[#allocation1] sm:$0xff] %v268
    %s270 = scalar_lea.vmem [#allocation0], 8
    %v271 = vld [vmem:[%s270] sm:$0xff]
    %s272 = scalar_lea.vmem [#allocation1], 8
    %v273 = vld [vmem:[%s272] sm:$0xff]
    %v274 = vmul.f32 %v273, %v250
    %275 = vadd.xlane.f32.xlu0 %v274
    %v276 = vpop.xlane.xlu0 %275
    %v277 = vsub.f32 %v271, %v276
    %v278 = vmul.f32 %v277, %v257
    %v279 = vsel %vm248, %v278, 0.0
    %v280 = vadd.f32 %v273, %v279
    %s281 = scalar_lea.vmem [#allocation1], 8
    %282 = vst [vmem:[%s281] sm:$0xff] %v280
    %vm283 = vcmask 64568
    %s284 = scalar_lea.vmem [#allocation1], 7
    %v285 = vld [vmem:[%s284] ss:$0 sm:$0xff]
    %s286 = scalar_lea.vmem [#allocation0], 7
    %v287 = vld [vmem:[%s286] ss:$0 sm:$0xff]
    %v288 = vmul.f32 %v285, %v285
    %289 = vadd.xlane.f32.xlu0 %v288
    %v290 = vpop.xlane.xlu0 %289
    %v291 = vsub.f32 %v287, %v290
    %v292 = vrsqrt.pop %v291
    %v293 = vld [vmem:[#allocation0] sm:$0xff]
    %v294 = vld [vmem:[#allocation1] sm:$0xff]
    %v295 = vmul.f32 %v294, %v285
    %296 = vadd.xlane.f32.xlu0 %v295
    %v297 = vpop.xlane.xlu0 %296
    %v298 = vsub.f32 %v293, %v297
    %v299 = vmul.f32 %v298, %v292
    %vm300 = vcmask 1047559
    %vm301 = vmand %vm283, %vm300
    %v302 = vsel %vm301, %v299, 0.0
    %v303 = vadd.f32 %v294, %v302
    %304 = vst [vmem:[#allocation1] sm:$0xff] %v303
    %s305 = scalar_lea.vmem [#allocation0], 8
    %v306 = vld [vmem:[%s305] sm:$0xff]
    %s307 = scalar_lea.vmem [#allocation1], 8
    %v308 = vld [vmem:[%s307] sm:$0xff]
    %v309 = vmul.f32 %v308, %v285
    %310 = vadd.xlane.f32.xlu0 %v309
    %v311 = vpop.xlane.xlu0 %310
    %v312 = vsub.f32 %v306, %v311
    %v313 = vmul.f32 %v312, %v292
    %v314 = vsel %vm283, %v313, 0.0
    %v315 = vadd.f32 %v308, %v314
    %s316 = scalar_lea.vmem [#allocation1], 8
    %317 = vst [vmem:[%s316] sm:$0xff] %v315
    %vm318 = vcmask 72768
    %s319 = scalar_lea.vmem [#allocation1], 8
    %v320 = vld [vmem:[%s319] ss:$0 sm:$0xff]
    %s321 = scalar_lea.vmem [#allocation0], 8
    %v322 = vld [vmem:[%s321] ss:$0 sm:$0xff]
    %v323 = vmul.f32 %v320, %v320
    %324 = vadd.xlane.f32.xlu0 %v323
    %v325 = vpop.xlane.xlu0 %324
    %v326 = vsub.f32 %v322, %v325
    %v327 = vrsqrt.pop %v326
    %s328 = scalar_lea.vmem [#allocation0], 8
    %v329 = vld [vmem:[%s328] sm:$0xff]
    %s330 = scalar_lea.vmem [#allocation1], 8
    %v331 = vld [vmem:[%s330] sm:$0xff]
    %v332 = vmul.f32 %v331, %v320
    %333 = vadd.xlane.f32.xlu0 %v332
    %v334 = vpop.xlane.xlu0 %333
    %v335 = vsub.f32 %v329, %v334
    %v336 = vmul.f32 %v335, %v327
    %v337 = vsel %vm318, %v336, 0.0
    %v338 = vadd.f32 %v331, %v337
    %s339 = scalar_lea.vmem [#allocation1], 8
    %340 = vst [vmem:[%s339] sm:$0xff] %v338
    %vm341 = vcmask 80968
    %s342 = scalar_lea.vmem [#allocation1], 9
    %v343 = vld [vmem:[%s342] ss:$0 sm:$0xff]
    %s344 = scalar_lea.vmem [#allocation0], 9
    %v345 = vld [vmem:[%s344] ss:$0 sm:$0xff]
    %v346 = vmul.f32 %v343, %v343
    %347 = vadd.xlane.f32.xlu0 %v346
    %v348 = vpop.xlane.xlu0 %347
    %v349 = vsub.f32 %v345, %v348
    %v350 = vrsqrt.pop %v349
    %s351 = scalar_lea.vmem [#allocation0], 8
    %v352 = vld [vmem:[%s351] sm:$0xff]
    %s353 = scalar_lea.vmem [#allocation1], 8
    %v354 = vld [vmem:[%s353] sm:$0xff]
    %v355 = vmul.f32 %v354, %v343
    %356 = vadd.xlane.f32.xlu0 %v355
    %v357 = vpop.xlane.xlu0 %356
    %v358 = vsub.f32 %v352, %v357
    %v359 = vmul.f32 %v358, %v350
    %vm360 = vcmask 1047553
    %vm361 = vmand %vm341, %vm360
    %v362 = vsel %vm361, %v359, 0.0
    %v363 = vadd.f32 %v354, %v362
    %s364 = scalar_lea.vmem [#allocation1], 8
    %365 = vst [vmem:[%s364] sm:$0xff] %v363
    %vm366 = vcmask 89168
    %s367 = scalar_lea.vmem [#allocation1], 10
    %v368 = vld [vmem:[%s367] ss:$0 sm:$0xff]
    %s369 = scalar_lea.vmem [#allocation0], 10
    %v370 = vld [vmem:[%s369] ss:$0 sm:$0xff]
    %v371 = vmul.f32 %v368, %v368
    %372 = vadd.xlane.f32.xlu0 %v371
    %v373 = vpop.xlane.xlu0 %372
    %v374 = vsub.f32 %v370, %v373
    %v375 = vrsqrt.pop %v374
    %s376 = scalar_lea.vmem [#allocation0], 8
    %v377 = vld [vmem:[%s376] sm:$0xff]
    %s378 = scalar_lea.vmem [#allocation1], 8
    %v379 = vld [vmem:[%s378] sm:$0xff]
    %v380 = vmul.f32 %v379, %v368
    %381 = vadd.xlane.f32.xlu0 %v380
    %v382 = vpop.xlane.xlu0 %381
    %v383 = vsub.f32 %v377, %v382
    %v384 = vmul.f32 %v383, %v375
    %vm385 = vcmask 1047554
    %vm386 = vmand %vm366, %vm385
    %v387 = vsel %vm386, %v384, 0.0
    %v388 = vadd.f32 %v379, %v387
    %s389 = scalar_lea.vmem [#allocation1], 8
    %390 = vst [vmem:[%s389] sm:$0xff] %v388
    %vm391 = vcmask 97368
    %s392 = scalar_lea.vmem [#allocation1], 11
    %v393 = vld [vmem:[%s392] ss:$0 sm:$0xff]
    %s394 = scalar_lea.vmem [#allocation0], 11
    %v395 = vld [vmem:[%s394] ss:$0 sm:$0xff]
    %v396 = vmul.f32 %v393, %v393
    %397 = vadd.xlane.f32.xlu0 %v396
    %v398 = vpop.xlane.xlu0 %397
    %v399 = vsub.f32 %v395, %v398
    %v400 = vrsqrt.pop %v399
    %s401 = scalar_lea.vmem [#allocation0], 8
    %v402 = vld [vmem:[%s401] sm:$0xff]
    %s403 = scalar_lea.vmem [#allocation1], 8
    %v404 = vld [vmem:[%s403] sm:$0xff]
    %v405 = vmul.f32 %v404, %v393
    %406 = vadd.xlane.f32.xlu0 %v405
    %v407 = vpop.xlane.xlu0 %406
    %v408 = vsub.f32 %v402, %v407
    %v409 = vmul.f32 %v408, %v400
    %vm410 = vcmask 1047555
    %vm411 = vmand %vm391, %vm410
    %v412 = vsel %vm411, %v409, 0.0
    %v413 = vadd.f32 %v404, %v412
    %s414 = scalar_lea.vmem [#allocation1], 8
    %415 = vst [vmem:[%s414] sm:$0xff] %v413
    %vm416 = vcmask 105568
    %s417 = scalar_lea.vmem [#allocation1], 12
    %v418 = vld [vmem:[%s417] ss:$0 sm:$0xff]
    %s419 = scalar_lea.vmem [#allocation0], 12
    %v420 = vld [vmem:[%s419] ss:$0 sm:$0xff]
    %v421 = vmul.f32 %v418, %v418
    %422 = vadd.xlane.f32.xlu0 %v421
    %v423 = vpop.xlane.xlu0 %422
    %v424 = vsub.f32 %v420, %v423
    %v425 = vrsqrt.pop %v424
    %s426 = scalar_lea.vmem [#allocation0], 8
    %v427 = vld [vmem:[%s426] sm:$0xff]
    %s428 = scalar_lea.vmem [#allocation1], 8
    %v429 = vld [vmem:[%s428] sm:$0xff]
    %v430 = vmul.f32 %v429, %v418
    %431 = vadd.xlane.f32.xlu0 %v430
    %v432 = vpop.xlane.xlu0 %431
    %v433 = vsub.f32 %v427, %v432
    %v434 = vmul.f32 %v433, %v425
    %vm435 = vcmask 1047556
    %vm436 = vmand %vm416, %vm435
    %v437 = vsel %vm436, %v434, 0.0
    %v438 = vadd.f32 %v429, %v437
    %s439 = scalar_lea.vmem [#allocation1], 8
    %440 = vst [vmem:[%s439] sm:$0xff] %v438
    %vm441 = vcmask 113768
    %s442 = scalar_lea.vmem [#allocation1], 13
    %v443 = vld [vmem:[%s442] ss:$0 sm:$0xff]
    %s444 = scalar_lea.vmem [#allocation0], 13
    %v445 = vld [vmem:[%s444] ss:$0 sm:$0xff]
    %v446 = vmul.f32 %v443, %v443
    %447 = vadd.xlane.f32.xlu0 %v446
    %v448 = vpop.xlane.xlu0 %447
    %v449 = vsub.f32 %v445, %v448
    %v450 = vrsqrt.pop %v449
    %s451 = scalar_lea.vmem [#allocation0], 8
    %v452 = vld [vmem:[%s451] sm:$0xff]
    %s453 = scalar_lea.vmem [#allocation1], 8
    %v454 = vld [vmem:[%s453] sm:$0xff]
    %v455 = vmul.f32 %v454, %v443
    %456 = vadd.xlane.f32.xlu0 %v455
    %v457 = vpop.xlane.xlu0 %456
    %v458 = vsub.f32 %v452, %v457
    %v459 = vmul.f32 %v458, %v450
    %vm460 = vcmask 1047557
    %vm461 = vmand %vm441, %vm460
    %v462 = vsel %vm461, %v459, 0.0
    %v463 = vadd.f32 %v454, %v462
    %s464 = scalar_lea.vmem [#allocation1], 8
    %465 = vst [vmem:[%s464] sm:$0xff] %v463
    %vm466 = vcmask 121968
    %s467 = scalar_lea.vmem [#allocation1], 14
    %v468 = vld [vmem:[%s467] ss:$0 sm:$0xff]
    %s469 = scalar_lea.vmem [#allocation0], 14
    %v470 = vld [vmem:[%s469] ss:$0 sm:$0xff]
    %v471 = vmul.f32 %v468, %v468
    %472 = vadd.xlane.f32.xlu0 %v471
    %v473 = vpop.xlane.xlu0 %472
    %v474 = vsub.f32 %v470, %v473
    %v475 = vrsqrt.pop %v474
    %s476 = scalar_lea.vmem [#allocation0], 8
    %v477 = vld [vmem:[%s476] sm:$0xff]
    %s478 = scalar_lea.vmem [#allocation1], 8
    %v479 = vld [vmem:[%s478] sm:$0xff]
    %v480 = vmul.f32 %v479, %v468
    %481 = vadd.xlane.f32.xlu0 %v480
    %v482 = vpop.xlane.xlu0 %481
    %v483 = vsub.f32 %v477, %v482
    %v484 = vmul.f32 %v483, %v475
    %vm485 = vcmask 1047558
    %vm486 = vmand %vm466, %vm485
    %v487 = vsel %vm486, %v484, 0.0
    %v488 = vadd.f32 %v479, %v487
    %s489 = scalar_lea.vmem [#allocation1], 8
    %490 = vst [vmem:[%s489] sm:$0xff] %v488
    %vm491 = vcmask 130168
    %s492 = scalar_lea.vmem [#allocation1], 15
    %v493 = vld [vmem:[%s492] ss:$0 sm:$0xff]
    %s494 = scalar_lea.vmem [#allocation0], 15
    %v495 = vld [vmem:[%s494] ss:$0 sm:$0xff]
    %v496 = vmul.f32 %v493, %v493
    %497 = vadd.xlane.f32.xlu0 %v496
    %v498 = vpop.xlane.xlu0 %497
    %v499 = vsub.f32 %v495, %v498
    %v500 = vrsqrt.pop %v499
    %s501 = scalar_lea.vmem [#allocation0], 8
    %v502 = vld [vmem:[%s501] sm:$0xff]
    %s503 = scalar_lea.vmem [#allocation1], 8
    %v504 = vld [vmem:[%s503] sm:$0xff]
    %v505 = vmul.f32 %v504, %v493
    %506 = vadd.xlane.f32.xlu0 %v505
    %v507 = vpop.xlane.xlu0 %506
    %v508 = vsub.f32 %v502, %v507
    %v509 = vmul.f32 %v508, %v500
    %vm510 = vcmask 1047559
    %vm511 = vmand %vm491, %vm510
    %v512 = vsel %vm511, %v509, 0.0
    %v513 = vadd.f32 %v504, %v512
    %s514 = scalar_lea.vmem [#allocation1], 8
    %515 = vst [vmem:[%s514] sm:$0xff] %v513
    // Predicated region
    $region36: #{custom-call.11} parent=1 // pred_check
      _
    $region37: #{custom-call.11} parent=1 // pred_check_branch
      %517 = sbr.rel (0) target = $region39
    $region38: #{custom-call.11} parent=1 // pred_region
      // Predicated region
      $region40: #{custom-call.11} parent=38 // pred_check
        _
      $region41: #{custom-call.11} parent=38 // pred_check_branch
        %519 = sbr.rel (0) target = $region43
      $region42: #{custom-call.11} parent=38 // pred_region
        // Predicated region
        $region55: #{custom-call.11} parent=42 // pred_check
          _
        $region56: #{custom-call.11} parent=42 // pred_check_branch
          %537 = sbr.rel (0) target = $region58
        $region57: #{custom-call.11} parent=42 // pred_region
          loop: start=0, step=1, limit=1
          $region59: #{custom-call.11} parent=57 // loop_pre_header
            _
          $region60: #{custom-call.11} parent=57 // loop_header
            %s539 = sphi 0, %s543
            %p540 = scmp.ge.s32.totalorder %s539, 1
            %s544 = sphi [#allocation1], [#allocation1]
            %s545 = sphi %s1, %s1
          $region61: #{custom-call.11} parent=57 // loop_header_branch
            %542 = sbr.rel (%p540) target = $region65
          $region62: #{custom-call.11} parent=57 // loop_body
            %v546 = vld [vmem:[%s544] sm:$0xff]
            %547 = vst [vmem:[%s545] sm:$0xff] %v546
            %v548 = vld [vmem:[%s544 + $0x8] sm:$0xff]
            %549 = vst [vmem:[%s545 + $0x8] sm:$0xff] %v548
          $region63: #{custom-call.11} parent=57 // loop_footer
            %s543 = sadd.s32 1, %s539
          $region64: #{custom-call.11} parent=57 // loop_footer_branch
            %538 = sbr.rel target = $region60
          $region65: #{custom-call.11} parent=57 // loop_exit
            _
        $region58: #{custom-call.11} parent=42 // pred_fallthru
          _
        // Predicated region
        $region66: #{custom-call.11} parent=42 // pred_check
          _
        $region67: #{custom-call.11} parent=42 // pred_check_branch
          %551 = sbr.rel target = $region69
        $region68: #{custom-call.11} parent=42 // pred_region
          _
        $region69: #{custom-call.11} parent=42 // pred_fallthru
          _
      $region43: #{custom-call.11} parent=38 // pred_fallthru
        _
      // Predicated region
      $region44: #{custom-call.11} parent=38 // pred_check
        _
      $region45: #{custom-call.11} parent=38 // pred_check_branch
        %521 = sbr.rel target = $region47
      $region46: #{custom-call.11} parent=38 // pred_region
        %s523 = ssub.s32 256, 1
        loop: start=0, step=1, limit=1
        $region48: #{custom-call.11} parent=46 // loop_pre_header
          _
        $region49: #{custom-call.11} parent=46 // loop_header
          %s525 = sphi 0, %s529
          %p526 = scmp.ge.s32.totalorder %s525, 1
          %s530 = sphi [#allocation1], [#allocation1]
          %s531 = sphi %s1, %s1
        $region50: #{custom-call.11} parent=46 // loop_header_branch
          %528 = sbr.rel (%p526) target = $region54
        $region51: #{custom-call.11} parent=46 // loop_body
          %v532 = vld [vmem:[%s530] sm:%s523]
          %533 = vst [vmem:[%s531] sm:%s523] %v532
          %v534 = vld [vmem:[%s530 + $0x8] sm:%s523]
          %535 = vst [vmem:[%s531 + $0x8] sm:%s523] %v534
        $region52: #{custom-call.11} parent=46 // loop_footer
          %s529 = sadd.s32 1, %s525
        $region53: #{custom-call.11} parent=46 // loop_footer_branch
          %524 = sbr.rel target = $region49
        $region54: #{custom-call.11} parent=46 // loop_exit
          _
      $region47: #{custom-call.11} parent=38 // pred_fallthru
        _
    $region39: #{custom-call.11} parent=1 // pred_fallthru
      _
    %552 = vnop

// kernel: custom-call.13
$region0: #{custom-call.13}
  %s0 = inlined_call_operand.vmem [shape: f32[1,16,16], index: 0, kind: input, shape index: {}]
  %s1 = inlined_call_operand.vmem [shape: f32[1,16,16], index: 1, kind: output, shape index: {}]
  $region1: #{custom-call.13} parent=0
    #allocation0 [shape = 'u8[8192]{0}', space=vmem, size = 0x2000, scoped, tag = 'operand span for operand 0']
    #allocation1 [shape = 'u8[8192]{0}', space=vmem, size = 0x2000, scoped, tag = 'operand span for operand 1']
    #allocation2 [shape = 'f32[16,16]{1,0}', space=vmem, size = 0x2000, scoped, tag = 'rescaled input a']
    // Predicated region
    $region2: #{custom-call.13} parent=1 // pred_check
      _
    $region3: #{custom-call.13} parent=1 // pred_check_branch
      %3 = sbr.rel (0) target = $region5
    $region4: #{custom-call.13} parent=1 // pred_region
      // Predicated region
      $region6: #{custom-call.13} parent=4 // pred_check
        _
      $region7: #{custom-call.13} parent=4 // pred_check_branch
        %5 = sbr.rel (0) target = $region9
      $region8: #{custom-call.13} parent=4 // pred_region
        // Predicated region
        $region21: #{custom-call.13} parent=8 // pred_check
          _
        $region22: #{custom-call.13} parent=8 // pred_check_branch
          %23 = sbr.rel (0) target = $region24
        $region23: #{custom-call.13} parent=8 // pred_region
          loop: start=0, step=1, limit=1
          $region25: #{custom-call.13} parent=23 // loop_pre_header
            _
          $region26: #{custom-call.13} parent=23 // loop_header
            %s25 = sphi 0, %s29
            %p26 = scmp.ge.s32.totalorder %s25, 1
            %s30 = sphi %s0, %s0
            %s31 = sphi [#allocation0], [#allocation0]
          $region27: #{custom-call.13} parent=23 // loop_header_branch
            %28 = sbr.rel (%p26) target = $region31
          $region28: #{custom-call.13} parent=23 // loop_body
            %v32 = vld [vmem:[%s30] sm:$0xff]
            %33 = vst [vmem:[%s31] sm:$0xff] %v32
            %v34 = vld [vmem:[%s30 + $0x8] sm:$0xff]
            %35 = vst [vmem:[%s31 + $0x8] sm:$0xff] %v34
          $region29: #{custom-call.13} parent=23 // loop_footer
            %s29 = sadd.s32 1, %s25
          $region30: #{custom-call.13} parent=23 // loop_footer_branch
            %24 = sbr.rel target = $region26
          $region31: #{custom-call.13} parent=23 // loop_exit
            _
        $region24: #{custom-call.13} parent=8 // pred_fallthru
          _
        // Predicated region
        $region32: #{custom-call.13} parent=8 // pred_check
          _
        $region33: #{custom-call.13} parent=8 // pred_check_branch
          %37 = sbr.rel target = $region35
        $region34: #{custom-call.13} parent=8 // pred_region
          _
        $region35: #{custom-call.13} parent=8 // pred_fallthru
          _
      $region9: #{custom-call.13} parent=4 // pred_fallthru
        _
      // Predicated region
      $region10: #{custom-call.13} parent=4 // pred_check
        _
      $region11: #{custom-call.13} parent=4 // pred_check_branch
        %7 = sbr.rel target = $region13
      $region12: #{custom-call.13} parent=4 // pred_region
        %s9 = ssub.s32 256, 1
        loop: start=0, step=1, limit=1
        $region14: #{custom-call.13} parent=12 // loop_pre_header
          _
        $region15: #{custom-call.13} parent=12 // loop_header
          %s11 = sphi 0, %s15
          %p12 = scmp.ge.s32.totalorder %s11, 1
          %s16 = sphi %s0, %s0
          %s17 = sphi [#allocation0], [#allocation0]
        $region16: #{custom-call.13} parent=12 // loop_header_branch
          %14 = sbr.rel (%p12) target = $region20
        $region17: #{custom-call.13} parent=12 // loop_body
          %v18 = vld [vmem:[%s16] sm:%s9]
          %19 = vst [vmem:[%s17] sm:%s9] %v18
          %v20 = vld [vmem:[%s16 + $0x8] sm:%s9]
          %21 = vst [vmem:[%s17 + $0x8] sm:%s9] %v20
        $region18: #{custom-call.13} parent=12 // loop_footer
          %s15 = sadd.s32 1, %s11
        $region19: #{custom-call.13} parent=12 // loop_footer_branch
          %10 = sbr.rel target = $region15
        $region20: #{custom-call.13} parent=12 // loop_exit
          _
      $region13: #{custom-call.13} parent=4 // pred_fallthru
        _
    $region5: #{custom-call.13} parent=1 // pred_fallthru
      _
    %38 = vnop
    %v39 = vlaneseq
    %v40 = vand.u32 %v39, 127
    %vm41 = vcmp.lt.s32.totalorder %v40, 16
    %v42 = vlaneseq
    %v43 = vshrl.u32 %v42, 7
    %vm45 = vcmp.eq.s32.totalorder %v43, %v40
    %v46 = vld [vmem:[#allocation0] sm:$0xff]
    %v47 = vsel %vm45, %v46, 0.0
    %48 = vadd.xlane.f32.xlu0 %v47
    %v49 = vpop.xlane.xlu0 %48
    %vm50 = vcmp.ge.s32.totalorder %v43, %v40
    %vm51 = vmand %vm50, %vm41
    %v52 = vsel %vm51, %v46, 0.0
    %v53 = vrcp.pop %v49
    %v54 = vmul.f32 %v52, %v53
    %55 = vst [vmem:[#allocation2] sm:$0xff] %v54
    %s56 = scalar_lea.vmem [#allocation0], 8
    %s57 = scalar_lea.vmem [#allocation2], 8
    %v58 = vlaneseq
    %v59 = vshrl.u32 %v58, 7
    %v60 = vadd.s32 %v59, 8
    %vm61 = vcmp.eq.s32.totalorder %v60, %v40
    %v62 = vld [vmem:[%s56] sm:$0xff]
    %v63 = vsel %vm61, %v62, 0.0
    %64 = vadd.xlane.f32.xlu0 %v63
    %v65 = vpop.xlane.xlu0 %64
    %vm66 = vcmp.ge.s32.totalorder %v60, %v40
    %vm67 = vmand %vm66, %vm41
    %v68 = vsel %vm67, %v62, 0.0
    %v69 = vrcp.pop %v65
    %v70 = vmul.f32 %v68, %v69
    %71 = vst [vmem:[%s57] sm:$0xff] %v70
    %v72 = vlaneseq
    %v73 = vand.u32 %v72, 127
    %v74 = vlaneseq
    %v75 = vshrl.u32 %v74, 7
    %vm77 = vcmp.eq.s32.totalorder %v73, %v75
    %v78 = vlaneseq
    %v79 = vand.u32 %v78, 127
    %vm80 = vcmp.eq.s32.totalorder %v79, 0
    %v81 = vsel %vm80, 1.0, -1.0
    %v82 = vsel %vm77, %v81, 0.0
    %v83 = vlaneseq
    %v84 = vand.u32 %v83, 127
    %v85 = vlaneseq
    %v86 = vshrl.u32 %v85, 7
    %v87 = vadd.s32 %v86, 8
    %vm88 = vcmp.eq.s32.totalorder %v84, %v87
    %v89 = vsel %vm88, -1.0, 0.0
    %s90 = scalar_lea.vmem [#allocation2], 1
    %v91 = vld [vmem:[%s90] ss:$0 sm:$0xff]
    %v92 = vxor.u32 %v91, 2147483648
    %v93 = vlaneseq
    %v94 = vand.u32 %v93, 127
    %vm95 = vcmp.eq.s32.totalorder %v94, 1
    %v96 = vmul.f32 %v92, %v82
    %97 = vadd.xlane.f32.xlu0 %v96
    %v98 = vpop.xlane.xlu0 %97
    %v99 = vsel %vm95, %v98, %v82
    %s100 = scalar_lea.vmem [#allocation2], 2
    %v101 = vld [vmem:[%s100] ss:$0 sm:$0xff]
    %v102 = vxor.u32 %v101, 2147483648
    %v103 = vlaneseq
    %v104 = vand.u32 %v103, 127
    %vm105 = vcmp.eq.s32.totalorder %v104, 2
    %v106 = vmul.f32 %v102, %v99
    %107 = vadd.xlane.f32.xlu0 %v106
    %v108 = vpop.xlane.xlu0 %107
    %v109 = vsel %vm105, %v108, %v99
    %s110 = scalar_lea.vmem [#allocation2], 3
    %v111 = vld [vmem:[%s110] ss:$0 sm:$0xff]
    %v112 = vxor.u32 %v111, 2147483648
    %v113 = vlaneseq
    %v114 = vand.u32 %v113, 127
    %vm115 = vcmp.eq.s32.totalorder %v114, 3
    %v116 = vmul.f32 %v112, %v109
    %117 = vadd.xlane.f32.xlu0 %v116
    %v118 = vpop.xlane.xlu0 %117
    %v119 = vsel %vm115, %v118, %v109
    %s120 = scalar_lea.vmem [#allocation2], 4
    %v121 = vld [vmem:[%s120] ss:$0 sm:$0xff]
    %v122 = vxor.u32 %v121, 2147483648
    %v123 = vlaneseq
    %v124 = vand.u32 %v123, 127
    %vm125 = vcmp.eq.s32.totalorder %v124, 4
    %v126 = vmul.f32 %v122, %v119
    %127 = vadd.xlane.f32.xlu0 %v126
    %v128 = vpop.xlane.xlu0 %127
    %v129 = vsel %vm125, %v128, %v119
    %s130 = scalar_lea.vmem [#allocation2], 5
    %v131 = vld [vmem:[%s130] ss:$0 sm:$0xff]
    %v132 = vxor.u32 %v131, 2147483648
    %v133 = vlaneseq
    %v134 = vand.u32 %v133, 127
    %vm135 = vcmp.eq.s32.totalorder %v134, 5
    %v136 = vmul.f32 %v132, %v129
    %137 = vadd.xlane.f32.xlu0 %v136
    %v138 = vpop.xlane.xlu0 %137
    %v139 = vsel %vm135, %v138, %v129
    %s140 = scalar_lea.vmem [#allocation2], 6
    %v141 = vld [vmem:[%s140] ss:$0 sm:$0xff]
    %v142 = vxor.u32 %v141, 2147483648
    %v143 = vlaneseq
    %v144 = vand.u32 %v143, 127
    %vm145 = vcmp.eq.s32.totalorder %v144, 6
    %v146 = vmul.f32 %v142, %v139
    %147 = vadd.xlane.f32.xlu0 %v146
    %v148 = vpop.xlane.xlu0 %147
    %v149 = vsel %vm145, %v148, %v139
    %s150 = scalar_lea.vmem [#allocation2], 7
    %v151 = vld [vmem:[%s150] ss:$0 sm:$0xff]
    %v152 = vxor.u32 %v151, 2147483648
    %v153 = vlaneseq
    %v154 = vand.u32 %v153, 127
    %vm155 = vcmp.eq.s32.totalorder %v154, 7
    %v156 = vmul.f32 %v152, %v149
    %157 = vadd.xlane.f32.xlu0 %v156
    %v158 = vpop.xlane.xlu0 %157
    %v159 = vsel %vm155, %v158, %v149
    %s160 = scalar_lea.vmem [#allocation2], 8
    %v161 = vld [vmem:[%s160] ss:$0 sm:$0xff]
    %v162 = vxor.u32 %v161, 2147483648
    %v163 = vlaneseq
    %v164 = vand.u32 %v163, 127
    %vm165 = vcmp.eq.s32.totalorder %v164, 8
    %v166 = vmul.f32 %v162, %v159
    %167 = vadd.xlane.f32.xlu0 %v166
    %v168 = vpop.xlane.xlu0 %167
    %v169 = vsel %vm165, %v168, %v159
    %v170 = vmul.f32 %v162, %v89
    %171 = vadd.xlane.f32.xlu0 %v170
    %v172 = vpop.xlane.xlu0 %171
    %v173 = vsel %vm165, %v172, %v89
    %s174 = scalar_lea.vmem [#allocation2], 9
    %v175 = vld [vmem:[%s174] ss:$0 sm:$0xff]
    %v176 = vxor.u32 %v175, 2147483648
    %v177 = vlaneseq
    %v178 = vand.u32 %v177, 127
    %vm179 = vcmp.eq.s32.totalorder %v178, 9
    %v180 = vmul.f32 %v176, %v169
    %181 = vadd.xlane.f32.xlu0 %v180
    %v182 = vpop.xlane.xlu0 %181
    %v183 = vsel %vm179, %v182, %v169
    %v184 = vmul.f32 %v176, %v173
    %185 = vadd.xlane.f32.xlu0 %v184
    %v186 = vpop.xlane.xlu0 %185
    %v187 = vsel %vm179, %v186, %v173
    %s188 = scalar_lea.vmem [#allocation2], 10
    %v189 = vld [vmem:[%s188] ss:$0 sm:$0xff]
    %v190 = vxor.u32 %v189, 2147483648
    %v191 = vlaneseq
    %v192 = vand.u32 %v191, 127
    %vm193 = vcmp.eq.s32.totalorder %v192, 10
    %v194 = vmul.f32 %v190, %v183
    %195 = vadd.xlane.f32.xlu0 %v194
    %v196 = vpop.xlane.xlu0 %195
    %v197 = vsel %vm193, %v196, %v183
    %v198 = vmul.f32 %v190, %v187
    %199 = vadd.xlane.f32.xlu0 %v198
    %v200 = vpop.xlane.xlu0 %199
    %v201 = vsel %vm193, %v200, %v187
    %s202 = scalar_lea.vmem [#allocation2], 11
    %v203 = vld [vmem:[%s202] ss:$0 sm:$0xff]
    %v204 = vxor.u32 %v203, 2147483648
    %v205 = vlaneseq
    %v206 = vand.u32 %v205, 127
    %vm207 = vcmp.eq.s32.totalorder %v206, 11
    %v208 = vmul.f32 %v204, %v197
    %209 = vadd.xlane.f32.xlu0 %v208
    %v210 = vpop.xlane.xlu0 %209
    %v211 = vsel %vm207, %v210, %v197
    %v212 = vmul.f32 %v204, %v201
    %213 = vadd.xlane.f32.xlu0 %v212
    %v214 = vpop.xlane.xlu0 %213
    %v215 = vsel %vm207, %v214, %v201
    %s216 = scalar_lea.vmem [#allocation2], 12
    %v217 = vld [vmem:[%s216] ss:$0 sm:$0xff]
    %v218 = vxor.u32 %v217, 2147483648
    %v219 = vlaneseq
    %v220 = vand.u32 %v219, 127
    %vm221 = vcmp.eq.s32.totalorder %v220, 12
    %v222 = vmul.f32 %v218, %v211
    %223 = vadd.xlane.f32.xlu0 %v222
    %v224 = vpop.xlane.xlu0 %223
    %v225 = vsel %vm221, %v224, %v211
    %v226 = vmul.f32 %v218, %v215
    %227 = vadd.xlane.f32.xlu0 %v226
    %v228 = vpop.xlane.xlu0 %227
    %v229 = vsel %vm221, %v228, %v215
    %s230 = scalar_lea.vmem [#allocation2], 13
    %v231 = vld [vmem:[%s230] ss:$0 sm:$0xff]
    %v232 = vxor.u32 %v231, 2147483648
    %v233 = vlaneseq
    %v234 = vand.u32 %v233, 127
    %vm235 = vcmp.eq.s32.totalorder %v234, 13
    %v236 = vmul.f32 %v232, %v225
    %237 = vadd.xlane.f32.xlu0 %v236
    %v238 = vpop.xlane.xlu0 %237
    %v239 = vsel %vm235, %v238, %v225
    %v240 = vmul.f32 %v232, %v229
    %241 = vadd.xlane.f32.xlu0 %v240
    %v242 = vpop.xlane.xlu0 %241
    %v243 = vsel %vm235, %v242, %v229
    %s244 = scalar_lea.vmem [#allocation2], 14
    %v245 = vld [vmem:[%s244] ss:$0 sm:$0xff]
    %v246 = vxor.u32 %v245, 2147483648
    %v247 = vlaneseq
    %v248 = vand.u32 %v247, 127
    %vm249 = vcmp.eq.s32.totalorder %v248, 14
    %v250 = vmul.f32 %v246, %v239
    %251 = vadd.xlane.f32.xlu0 %v250
    %v252 = vpop.xlane.xlu0 %251
    %v253 = vsel %vm249, %v252, %v239
    %v254 = vmul.f32 %v246, %v243
    %255 = vadd.xlane.f32.xlu0 %v254
    %v256 = vpop.xlane.xlu0 %255
    %v257 = vsel %vm249, %v256, %v243
    %s258 = scalar_lea.vmem [#allocation2], 15
    %v259 = vld [vmem:[%s258] ss:$0 sm:$0xff]
    %v260 = vxor.u32 %v259, 2147483648
    %v261 = vlaneseq
    %v262 = vand.u32 %v261, 127
    %vm263 = vcmp.eq.s32.totalorder %v262, 15
    %v264 = vmul.f32 %v260, %v253
    %265 = vadd.xlane.f32.xlu0 %v264
    %v266 = vpop.xlane.xlu0 %265
    %v267 = vsel %vm263, %v266, %v253
    %v268 = vmul.f32 %v260, %v257
    %269 = vadd.xlane.f32.xlu0 %v268
    %v270 = vpop.xlane.xlu0 %269
    %v271 = vsel %vm263, %v270, %v257
    %v272 = vrcp.pop %v49
    %v273 = vmul.f32 %v267, %v272
    %vm274 = vweird.f32 %v49
    %v275 = vsel %vm274, %v267, %v273
    %276 = vst [vmem:[#allocation1] sm:$0xff] %v275
    %v277 = vrcp.pop %v65
    %v278 = vmul.f32 %v271, %v277
    %vm279 = vweird.f32 %v65
    %v280 = vsel %vm279, %v271, %v278
    %s281 = scalar_lea.vmem [#allocation1], 8
    %282 = vst [vmem:[%s281] sm:$0xff] %v280
    // Predicated region
    $region36: #{custom-call.13} parent=1 // pred_check
      _
    $region37: #{custom-call.13} parent=1 // pred_check_branch
      %284 = sbr.rel (0) target = $region39
    $region38: #{custom-call.13} parent=1 // pred_region
      // Predicated region
      $region40: #{custom-call.13} parent=38 // pred_check
        _
      $region41: #{custom-call.13} parent=38 // pred_check_branch
        %286 = sbr.rel (0) target = $region43
      $region42: #{custom-call.13} parent=38 // pred_region
        // Predicated region
        $region55: #{custom-call.13} parent=42 // pred_check
          _
        $region56: #{custom-call.13} parent=42 // pred_check_branch
          %304 = sbr.rel (0) target = $region58
        $region57: #{custom-call.13} parent=42 // pred_region
          loop: start=0, step=1, limit=1
          $region59: #{custom-call.13} parent=57 // loop_pre_header
            _
          $region60: #{custom-call.13} parent=57 // loop_header
            %s306 = sphi 0, %s310
            %p307 = scmp.ge.s32.totalorder %s306, 1
            %s311 = sphi [#allocation1], [#allocation1]
            %s312 = sphi %s1, %s1
          $region61: #{custom-call.13} parent=57 // loop_header_branch
            %309 = sbr.rel (%p307) target = $region65
          $region62: #{custom-call.13} parent=57 // loop_body
            %v313 = vld [vmem:[%s311] sm:$0xff]
            %314 = vst [vmem:[%s312] sm:$0xff] %v313
            %v315 = vld [vmem:[%s311 + $0x8] sm:$0xff]
            %316 = vst [vmem:[%s312 + $0x8] sm:$0xff] %v315
          $region63: #{custom-call.13} parent=57 // loop_footer
            %s310 = sadd.s32 1, %s306
          $region64: #{custom-call.13} parent=57 // loop_footer_branch
            %305 = sbr.rel target = $region60
          $region65: #{custom-call.13} parent=57 // loop_exit
            _
        $region58: #{custom-call.13} parent=42 // pred_fallthru
          _
        // Predicated region
        $region66: #{custom-call.13} parent=42 // pred_check
          _
        $region67: #{custom-call.13} parent=42 // pred_check_branch
          %318 = sbr.rel target = $region69
        $region68: #{custom-call.13} parent=42 // pred_region
          _
        $region69: #{custom-call.13} parent=42 // pred_fallthru
          _
      $region43: #{custom-call.13} parent=38 // pred_fallthru
        _
      // Predicated region
      $region44: #{custom-call.13} parent=38 // pred_check
        _
      $region45: #{custom-call.13} parent=38 // pred_check_branch
        %288 = sbr.rel target = $region47
      $region46: #{custom-call.13} parent=38 // pred_region
        %s290 = ssub.s32 256, 1
        loop: start=0, step=1, limit=1
        $region48: #{custom-call.13} parent=46 // loop_pre_header
          _
        $region49: #{custom-call.13} parent=46 // loop_header
          %s292 = sphi 0, %s296
          %p293 = scmp.ge.s32.totalorder %s292, 1
          %s297 = sphi [#allocation1], [#allocation1]
          %s298 = sphi %s1, %s1
        $region50: #{custom-call.13} parent=46 // loop_header_branch
          %295 = sbr.rel (%p293) target = $region54
        $region51: #{custom-call.13} parent=46 // loop_body
          %v299 = vld [vmem:[%s297] sm:%s290]
          %300 = vst [vmem:[%s298] sm:%s290] %v299
          %v301 = vld [vmem:[%s297 + $0x8] sm:%s290]
          %302 = vst [vmem:[%s298 + $0x8] sm:%s290] %v301
        $region52: #{custom-call.13} parent=46 // loop_footer
          %s296 = sadd.s32 1, %s292
        $region53: #{custom-call.13} parent=46 // loop_footer_branch
          %291 = sbr.rel target = $region49
        $region54: #{custom-call.13} parent=46 // loop_exit
          _
      $region47: #{custom-call.13} parent=38 // pred_fallthru
        _
    $region39: #{custom-call.13} parent=1 // pred_fallthru
      _
    %319 = vnop

// kernel: sgpr_forward.1
$region0: #{sgpr_forward.1}
  #allocation0 [shape = 'u32[]', space=smem, size = 0x4, offset = 0x4, fixed_abs, tag = 'smem constant byte address 0x4 - core index']
  #allocation1 [shape = 'u32[144,128]{1,0:T(1,128)}', space=vmem, size = 0x12000, scoped, tag = 'internal scratch']
  #allocation2 [shape = 'f32[16,16]{1,0:T(8,128)}', space=vmem, size = 0x2000, scoped, tag = 'scratch operand']
  #allocation3 [shape = 'f32[16,1]{1,0:T(8,128)}', space=vmem, size = 0x2000, scoped, tag = 'scratch operand']
  %s0 = inlined_call_operand.vmem [shape: f32[16,8], index: 0, kind: input, shape index: {}]
  %s1 = inlined_call_operand.vmem [shape: f32[8,256], index: 1, kind: input, shape index: {}]
  %s2 = inlined_call_operand.vmem [shape: f32[1,256], index: 2, kind: input, shape index: {}]
  %s3 = inlined_call_operand.vmem [shape: f32[1,16,16], index: 3, kind: output, shape index: {0}]
  %s4 = inlined_call_operand.vmem [shape: f32[1,16,1], index: 4, kind: output, shape index: {1}]
  %5 = xla_tuple %s3, %s4
  %s6 = sld [smem:[#allocation0]]
  $region38: #{sgpr_forward.1} parent=0
    _
  %s8 = ssub.s32 1, %s6
  %s9 = scalar_select 0, %s8, %s6
  // Predicated region
  $region2: #{sgpr_forward.1} parent=0 // pred_check
    _
  $region3: #{sgpr_forward.1} parent=0 // pred_check_branch
    %11 = sbr.rel (0) target = $region5
  $region4: #{sgpr_forward.1} parent=0 // pred_region
    _
  $region5: #{sgpr_forward.1} parent=0 // pred_fallthru
    _
  // Predicated region
  $region6: #{sgpr_forward.1} parent=0 // pred_check
    _
  $region7: #{sgpr_forward.1} parent=0 // pred_check_branch
    %13 = sbr.rel (0) target = $region9
  $region8: #{sgpr_forward.1} parent=0 // pred_region
    %s14 = sadd.s32 0, 0
    %s15 = smul.u32 2, %s14
    %p16 = scmp.lt.s32.totalorder %s15, 1
    %s17 = scalar_select %p16, %s15, 1
    %s18 = smul.addr %s17, 8
    %s19 = scalar_lea.vmem %s1, %s18
    %s20 = sadd.s32 0, 0
    %s21 = smul.u32 2, %s20
  $region9: #{sgpr_forward.1} parent=0 // pred_fallthru
    _
  // Predicated region
  $region10: #{sgpr_forward.1} parent=0 // pred_check
    _
  $region11: #{sgpr_forward.1} parent=0 // pred_check_branch
    %23 = sbr.rel (0) target = $region13
  $region12: #{sgpr_forward.1} parent=0 // pred_region
    %s24 = sadd.s32 0, 0
    %s25 = smul.u32 2, %s24
    %p26 = scmp.lt.s32.totalorder %s25, 1
    %s27 = scalar_select %p26, %s25, 1
    %s28 = scalar_lea.vmem %s2, %s27
    %s29 = sadd.s32 0, 0
    %s30 = smul.u32 2, %s29
  $region13: #{sgpr_forward.1} parent=0 // pred_fallthru
    _
  %s31 = sadd.s32 0, 0
  %s32 = smul.u32 2, %s31
  %p33 = scmp.lt.s32.totalorder %s32, 1
  %s34 = scalar_select %p33, %s32, 1
  %s35 = smul.addr %s34, 8
  %s36 = scalar_lea.vmem %s1, %s35
  %s37 = sadd.s32 0, 0
  %s38 = smul.u32 2, %s37
  %p39 = scmp.lt.s32.totalorder %s38, 1
  %s40 = scalar_select %p39, %s38, 1
  %s41 = scalar_lea.vmem %s2, %s40
  %s42 = sadd.s32 0, 0
  %s43 = smul.u32 2, %s42
  %p44 = scmp.lt.s32.totalorder %s43, 1
  %s45 = scalar_select %p44, %s43, 1
  %s46 = smul.addr %s45, 8
  %s47 = scalar_lea.vmem %s1, %s46
  %s48 = sadd.s32 0, 0
  %s49 = smul.u32 2, %s48
  %s50 = sadd.s32 0, 0
  %s51 = smul.u32 2, %s50
  %p52 = scmp.lt.s32.totalorder %s51, 1
  %s53 = scalar_select %p52, %s51, 1
  %s54 = scalar_lea.vmem %s2, %s53
  %s55 = sadd.s32 0, 0
  %s56 = smul.u32 2, %s55
  %p58 = scmp.eq.s32.totalorder 0, 0
  // Predicated region
  $region14: #{sgpr_forward.1} parent=0 // pred_check
    %p59 = pneg %p58
  $region15: #{sgpr_forward.1} parent=0 // pred_check_branch
    %61 = sbr.rel (%p59) target = $region17
  $region16: #{sgpr_forward.1} parent=0 // pred_region
    %vm62 = vcmask 130048
    %63 = vst.msk [vmem:[#allocation2] sm:$0xff] %vm62, 0.0
    %64 = vst.msk [vmem:[#allocation2 + $0x8] sm:$0xff] %vm62, 0.0
    %vm65 = vcmask 7168
    %66 = vst.msk [vmem:[#allocation3] sm:$0xff] %vm65, 0.0
    %67 = vst.msk [vmem:[#allocation3 + $0x8] sm:$0xff] %vm65, 0.0
  $region17: #{sgpr_forward.1} parent=0 // pred_fallthru
    _
  %v68 = vld [vmem:[%s0] sm:$0xff]
  %v69 = vld [vmem:[%s0 + $0x8] sm:$0xff]
  %v70 = vld [vmem:[%s47] sm:$0xff]
  %v71 = vld [vmem:[%s47 + $0x8] sm:$0xff]
  %v72 = vld [vmem:[%s54] sm:$0x3]
  %74 = vset.pattern.permute.xlu0 0
  %75 = vperm.xlu0 %74, %v68
  %v76 = vpop.permute.xlu0 %75
  %79 = vset.pattern.permute.xlu0 0
  %80 = vperm.xlu0 %79, %v69
  %v81 = vpop.permute.xlu0 %80
  %v83 = vlaneseq
  %v84 = vshrl.u32 %v83, 7
  %v85 = vsub.s32 0, %v84
  %v86 = vrot.slane %v70, %v85
  %v87 = vlaneseq
  %v88 = vshrl.u32 %v87, 7
  %v89 = vsub.s32 0, %v88
  %v90 = vrot.slane %v71, %v89
  %v91 = vsub.f32 %v76, %v86
  %v92 = vsub.f32 %v76, %v90
  %v93 = vsub.f32 %v81, %v86
  %v94 = vsub.f32 %v81, %v90
  %v95 = vmul.f32 %v91, %v91
  %v96 = vmul.f32 %v92, %v92
  %v97 = vmul.f32 %v93, %v93
  %v98 = vmul.f32 %v94, %v94
  %99 = vset.pattern.permute.xlu0 1
  %100 = vperm.xlu0 %99, %v68
  %v101 = vpop.permute.xlu0 %100
  %103 = vset.pattern.permute.xlu0 1
  %104 = vperm.xlu0 %103, %v69
  %v105 = vpop.permute.xlu0 %104
  %v107 = vlaneseq
  %v108 = vshrl.u32 %v107, 7
  %v109 = vsub.s32 1, %v108
  %v110 = vrot.slane %v70, %v109
  %v111 = vlaneseq
  %v112 = vshrl.u32 %v111, 7
  %v113 = vsub.s32 1, %v112
  %v114 = vrot.slane %v71, %v113
  %v115 = vsub.f32 %v101, %v110
  %v116 = vsub.f32 %v101, %v114
  %v117 = vsub.f32 %v105, %v110
  %v118 = vsub.f32 %v105, %v114
  %v119 = vmul.f32 %v115, %v115
  %v120 = vmul.f32 %v116, %v116
  %v121 = vmul.f32 %v117, %v117
  %v122 = vmul.f32 %v118, %v118
  %v123 = vadd.f32 %v95, %v119
  %v124 = vadd.f32 %v96, %v120
  %v125 = vadd.f32 %v97, %v121
  %v126 = vadd.f32 %v98, %v122
  %127 = vset.pattern.permute.xlu0 2
  %128 = vperm.xlu0 %127, %v68
  %v129 = vpop.permute.xlu0 %128
  %131 = vset.pattern.permute.xlu0 2
  %132 = vperm.xlu0 %131, %v69
  %v133 = vpop.permute.xlu0 %132
  %v135 = vlaneseq
  %v136 = vshrl.u32 %v135, 7
  %v137 = vsub.s32 2, %v136
  %v138 = vrot.slane %v70, %v137
  %v139 = vlaneseq
  %v140 = vshrl.u32 %v139, 7
  %v141 = vsub.s32 2, %v140
  %v142 = vrot.slane %v71, %v141
  %v143 = vsub.f32 %v129, %v138
  %v144 = vsub.f32 %v129, %v142
  %v145 = vsub.f32 %v133, %v138
  %v146 = vsub.f32 %v133, %v142
  %v147 = vmul.f32 %v143, %v143
  %v148 = vmul.f32 %v144, %v144
  %v149 = vmul.f32 %v145, %v145
  %v150 = vmul.f32 %v146, %v146
  %v151 = vadd.f32 %v123, %v147
  %v152 = vadd.f32 %v124, %v148
  %v153 = vadd.f32 %v125, %v149
  %v154 = vadd.f32 %v126, %v150
  %155 = vset.pattern.permute.xlu0 3
  %156 = vperm.xlu0 %155, %v68
  %v157 = vpop.permute.xlu0 %156
  %159 = vset.pattern.permute.xlu0 3
  %160 = vperm.xlu0 %159, %v69
  %v161 = vpop.permute.xlu0 %160
  %v163 = vlaneseq
  %v164 = vshrl.u32 %v163, 7
  %v165 = vsub.s32 3, %v164
  %v166 = vrot.slane %v70, %v165
  %v167 = vlaneseq
  %v168 = vshrl.u32 %v167, 7
  %v169 = vsub.s32 3, %v168
  %v170 = vrot.slane %v71, %v169
  %v171 = vsub.f32 %v157, %v166
  %v172 = vsub.f32 %v157, %v170
  %v173 = vsub.f32 %v161, %v166
  %v174 = vsub.f32 %v161, %v170
  %v175 = vmul.f32 %v171, %v171
  %v176 = vmul.f32 %v172, %v172
  %v177 = vmul.f32 %v173, %v173
  %v178 = vmul.f32 %v174, %v174
  %v179 = vadd.f32 %v151, %v175
  %v180 = vadd.f32 %v152, %v176
  %v181 = vadd.f32 %v153, %v177
  %v182 = vadd.f32 %v154, %v178
  %183 = vset.pattern.permute.xlu0 4
  %184 = vperm.xlu0 %183, %v68
  %v185 = vpop.permute.xlu0 %184
  %187 = vset.pattern.permute.xlu0 4
  %188 = vperm.xlu0 %187, %v69
  %v189 = vpop.permute.xlu0 %188
  %v191 = vlaneseq
  %v192 = vshrl.u32 %v191, 7
  %v193 = vsub.s32 4, %v192
  %v194 = vrot.slane %v70, %v193
  %v195 = vlaneseq
  %v196 = vshrl.u32 %v195, 7
  %v197 = vsub.s32 4, %v196
  %v198 = vrot.slane %v71, %v197
  %v199 = vsub.f32 %v185, %v194
  %v200 = vsub.f32 %v185, %v198
  %v201 = vsub.f32 %v189, %v194
  %v202 = vsub.f32 %v189, %v198
  %v203 = vmul.f32 %v199, %v199
  %v204 = vmul.f32 %v200, %v200
  %v205 = vmul.f32 %v201, %v201
  %v206 = vmul.f32 %v202, %v202
  %v207 = vadd.f32 %v179, %v203
  %v208 = vadd.f32 %v180, %v204
  %v209 = vadd.f32 %v181, %v205
  %v210 = vadd.f32 %v182, %v206
  %211 = vset.pattern.permute.xlu0 5
  %212 = vperm.xlu0 %211, %v68
  %v213 = vpop.permute.xlu0 %212
  %215 = vset.pattern.permute.xlu0 5
  %216 = vperm.xlu0 %215, %v69
  %v217 = vpop.permute.xlu0 %216
  %v219 = vlaneseq
  %v220 = vshrl.u32 %v219, 7
  %v221 = vsub.s32 5, %v220
  %v222 = vrot.slane %v70, %v221
  %v223 = vlaneseq
  %v224 = vshrl.u32 %v223, 7
  %v225 = vsub.s32 5, %v224
  %v226 = vrot.slane %v71, %v225
  %v227 = vsub.f32 %v213, %v222
  %v228 = vsub.f32 %v213, %v226
  %v229 = vsub.f32 %v217, %v222
  %v230 = vsub.f32 %v217, %v226
  %v231 = vmul.f32 %v227, %v227
  %v232 = vmul.f32 %v228, %v228
  %v233 = vmul.f32 %v229, %v229
  %v234 = vmul.f32 %v230, %v230
  %v235 = vadd.f32 %v207, %v231
  %v236 = vadd.f32 %v208, %v232
  %v237 = vadd.f32 %v209, %v233
  %v238 = vadd.f32 %v210, %v234
  %239 = vset.pattern.permute.xlu0 6
  %240 = vperm.xlu0 %239, %v68
  %v241 = vpop.permute.xlu0 %240
  %243 = vset.pattern.permute.xlu0 6
  %244 = vperm.xlu0 %243, %v69
  %v245 = vpop.permute.xlu0 %244
  %v247 = vlaneseq
  %v248 = vshrl.u32 %v247, 7
  %v249 = vsub.s32 6, %v248
  %v250 = vrot.slane %v70, %v249
  %v251 = vlaneseq
  %v252 = vshrl.u32 %v251, 7
  %v253 = vsub.s32 6, %v252
  %v254 = vrot.slane %v71, %v253
  %v255 = vsub.f32 %v241, %v250
  %v256 = vsub.f32 %v241, %v254
  %v257 = vsub.f32 %v245, %v250
  %v258 = vsub.f32 %v245, %v254
  %v259 = vmul.f32 %v255, %v255
  %v260 = vmul.f32 %v256, %v256
  %v261 = vmul.f32 %v257, %v257
  %v262 = vmul.f32 %v258, %v258
  %v263 = vadd.f32 %v235, %v259
  %v264 = vadd.f32 %v236, %v260
  %v265 = vadd.f32 %v237, %v261
  %v266 = vadd.f32 %v238, %v262
  %267 = vset.pattern.permute.xlu0 7
  %268 = vperm.xlu0 %267, %v68
  %v269 = vpop.permute.xlu0 %268
  %271 = vset.pattern.permute.xlu0 7
  %272 = vperm.xlu0 %271, %v69
  %v273 = vpop.permute.xlu0 %272
  %v275 = vlaneseq
  %v276 = vshrl.u32 %v275, 7
  %v277 = vsub.s32 7, %v276
  %v278 = vrot.slane %v70, %v277
  %v279 = vlaneseq
  %v280 = vshrl.u32 %v279, 7
  %v281 = vsub.s32 7, %v280
  %v282 = vrot.slane %v71, %v281
  %v283 = vsub.f32 %v269, %v278
  %v284 = vsub.f32 %v269, %v282
  %v285 = vsub.f32 %v273, %v278
  %v286 = vsub.f32 %v273, %v282
  %v287 = vmul.f32 %v283, %v283
  %v288 = vmul.f32 %v284, %v284
  %v289 = vmul.f32 %v285, %v285
  %v290 = vmul.f32 %v286, %v286
  %v291 = vadd.f32 %v263, %v287
  %v292 = vadd.f32 %v264, %v288
  %v293 = vadd.f32 %v265, %v289
  %v294 = vadd.f32 %v266, %v290
  %v295 = vsub.f32 0.0, %v291
  %v296 = vsub.f32 0.0, %v292
  %v297 = vsub.f32 0.0, %v293
  %v298 = vsub.f32 0.0, %v294
  %v299 = vmul.f32 %v295, 1.442695
  %v300 = vpow.pop %v299
  %v301 = vmul.f32 %v296, 1.442695
  %v302 = vpow.pop %v301
  %v303 = vmul.f32 %v297, 1.442695
  %v304 = vpow.pop %v303
  %v305 = vmul.f32 %v298, 1.442695
  %v306 = vpow.pop %v305
  %v307 = vpack.c.bf16 %v304, %v300
  %v308 = vpack.c.bf16 %v306, %v302
  %v309 = vld [vmem:[#allocation2] sm:$0xff]
  %v310 = vld [vmem:[#allocation2 + $0x8] sm:$0xff]
  %311 = vmatprep.subr.bf16.mxu0 0
  %312 = vmatpush1.bf16.xpose.msra.mxu0 0
  %313 = vmatprep.subr.bf16.mxu0 0
  %314 = vmatpush1.bf16.xpose.msra.mxu0 0
  %315 = vmatprep.subr.bf16.mxu0 0
  %316 = vmatpush1.bf16.xpose.msra.mxu0 0
  %317 = vmatprep.subr.bf16.mxu0 0
  %318 = vmatpush1.bf16.xpose.msra.mxu0 0
  %319 = vmatprep.subr.bf16.mxu0 0
  %320 = vmatpush1.bf16.xpose.msra.mxu0 0
  %321 = vmatprep.subr.bf16.mxu0 0
  %322 = vmatpush1.bf16.xpose.msra.mxu0 0
  %323 = vmatprep.subr.bf16.mxu0 0
  %324 = vmatpush1.bf16.xpose.msra.mxu0 0
  %325 = vmatprep.subr.bf16.mxu0 %v308
  %326 = vmatpush1.bf16.xpose.msra.mxu0 %v307
  %327 = vmatprep.subr.bf16.mxu0 0
  %328 = vmatpush2.bf16.xpose.msra.mxu0 0
  %329 = vmatprep.subr.bf16.mxu0 0
  %330 = vmatpush2.bf16.xpose.msra.mxu0 0
  %331 = vmatprep.subr.bf16.mxu0 0
  %332 = vmatpush2.bf16.xpose.msra.mxu0 0
  %333 = vmatprep.subr.bf16.mxu0 0
  %334 = vmatpush2.bf16.xpose.msra.mxu0 0
  %335 = vmatprep.subr.bf16.mxu0 0
  %336 = vmatpush2.bf16.xpose.msra.mxu0 0
  %337 = vmatprep.subr.bf16.mxu0 0
  %338 = vmatpush2.bf16.xpose.msra.mxu0 0
  %339 = vmatprep.subr.bf16.mxu0 0
  %340 = vmatpush2.bf16.xpose.msra.mxu0 0
  %341 = vmatprep.subr.bf16.mxu0 0
  %342 = vmatpush2.bf16.xpose.msra.mxu0 0
  %343 = vmatprep.mubr.bf16.mxu0 %v308
  %344 = vmatmul.mubr.bf16.gmra.mxu0 %v307
  %v345 = vpop.f32.mrf.mxu0
  %v346 = vadd.f32 0.0, %v345
  %v347 = vpop.f32.mrf.mxu0
  %v348 = vpop.f32.mrf.mxu0
  %v349 = vadd.f32 0.0, %v348
  %v350 = vpop.f32.mrf.mxu0
  %351 = vdwg.mxu0
  %v352 = vadd.f32 %v309, %v346
  %v353 = vadd.f32 %v310, %v349
  %vm354 = vcmask 130048
  %355 = vst.msk [vmem:[#allocation2] sm:$0xff] %vm354, %v352
  %356 = vst.msk [vmem:[#allocation2 + $0x8] sm:$0xff] %vm354, %v353
  %v357 = vld [vmem:[#allocation3] sm:$0xff]
  %v358 = vld [vmem:[#allocation3 + $0x8] sm:$0xff]
  %v360 = vlaneseq
  %v361 = vshrl.u32 %v360, 7
  %v362 = vsub.s32 0, %v361
  %v363 = vrot.slane %v72, %v362
  %v364 = vlaneseq
  %v365 = vshrl.u32 %v364, 7
  %v366 = vsub.s32 1, %v365
  %v367 = vrot.slane %v72, %v366
  %v370 = vmul.f32 %v300, %v363
  %v371 = vmul.f32 %v302, %v367
  %v372 = vmul.f32 %v304, %v363
  %v373 = vmul.f32 %v306, %v367
  %v374 = vadd.f32 %v370, %v371
  %375 = vadd.xlane.f32.xlu0 %v374
  %v376 = vpop.xlane.xlu0 %375
  %v377 = vadd.f32 %v372, %v373
  %378 = vadd.xlane.f32.xlu0 %v377
  %v379 = vpop.xlane.xlu0 %378
  %v380 = vadd.f32 %v357, %v376
  %v381 = vadd.f32 %v358, %v379
  %vm382 = vcmask 7168
  %383 = vst.msk [vmem:[#allocation3] sm:$0xff] %vm382, %v380
  %384 = vst.msk [vmem:[#allocation3 + $0x8] sm:$0xff] %vm382, %v381
  // Predicated region
  $region18: #{sgpr_forward.1} parent=0 // pred_check
    %p385 = pneg %p58
  $region19: #{sgpr_forward.1} parent=0 // pred_check_branch
    %387 = sbr.rel (%p385) target = $region21
  $region20: #{sgpr_forward.1} parent=0 // pred_region
    %v388 = vld [vmem:[#allocation2] sm:$0xff]
    %v389 = vld [vmem:[#allocation2 + $0x8] sm:$0xff]
    %390 = vst.msk [vmem:[%s3] sm:$0xff] %vm354, %v388
    %391 = vst.msk [vmem:[%s3 + $0x8] sm:$0xff] %vm354, %v389
    %v392 = vld [vmem:[#allocation3] sm:$0xff]
    %v393 = vld [vmem:[#allocation3 + $0x8] sm:$0xff]
    %394 = vst.msk [vmem:[%s4] sm:$0xff] %vm382, %v392
    %395 = vst.msk [vmem:[%s4 + $0x8] sm:$0xff] %vm382, %v393
  $region21: #{sgpr_forward.1} parent=0 // pred_fallthru
    _
  // Predicated region
  $region22: #{sgpr_forward.1} parent=0 // pred_check
    _
  $region23: #{sgpr_forward.1} parent=0 // pred_check_branch
    %397 = sbr.rel (0) target = $region25
  $region24: #{sgpr_forward.1} parent=0 // pred_region
    _
  $region25: #{sgpr_forward.1} parent=0 // pred_fallthru
    _
  // Predicated region
  $region26: #{sgpr_forward.1} parent=0 // pred_check
    _
  $region27: #{sgpr_forward.1} parent=0 // pred_check_branch
    %399 = sbr.rel (0) target = $region29
  $region28: #{sgpr_forward.1} parent=0 // pred_region
    _
  $region29: #{sgpr_forward.1} parent=0 // pred_fallthru
    _
  // Predicated region
  $region30: #{sgpr_forward.1} parent=0 // pred_check
    _
  $region31: #{sgpr_forward.1} parent=0 // pred_check_branch
    %401 = sbr.rel (0) target = $region33
  $region32: #{sgpr_forward.1} parent=0 // pred_region
    _
  $region33: #{sgpr_forward.1} parent=0 // pred_fallthru
    _
  // Predicated region
  $region34: #{sgpr_forward.1} parent=0 // pred_check
    _
  $region35: #{sgpr_forward.1} parent=0 // pred_check_branch
    %403 = sbr.rel (0) target = $region37
  $region36: #{sgpr_forward.1} parent=0 // pred_region
    _
  $region37: #{sgpr_forward.1} parent=0 // pred_fallthru
    _

</llo_original>
